<compile_context>
chip_gen: v7x
topology: tpu7x:2x2x1
jax: 0.10.0
libtpu: 0.0.40
codegen_flags: <defaults>
</compile_context>

<pallas_src>
import jax
import jax.numpy as jnp
from jax.experimental import pallas as pl
from jax.experimental.pallas import tpu as pltpu

EPS = 1e-5


# ------------------------------ in-kernel helpers ------------------------------

def _im2col_matmul(pad_ref, w_ref, N, H, W, C):
    """3x3 'SAME' conv of the padded scratch as ONE MXU matmul with K = 9*C.

    Taps are sliced from the f32 scratch (tile-aligned views), cast to bf16 at
    (NHW, C) granularity, then lane-concatenated, so the dominant staging move
    (the concat) is bf16 while every relayout stays aligned.
    """
    NHW = N * H * W
    # 3 W-shifted (sublane-shifted) views staged once; H shifts are free major-dim slices.
    xs = [pad_ref[:, :, dw:dw + W, :] for dw in range(3)]          # (N, Hp, W, C) f32
    taps = [xs[dw][:, dh:dh + H, :, :].reshape(NHW, C).astype(jnp.bfloat16)
            for dh in range(3) for dw in range(3)]
    slab = jnp.concatenate(taps, axis=-1)                          # (NHW, 9*C) bf16
    return jnp.dot(slab, w_ref[...], preferred_element_type=jnp.float32)  # (NHW, C) f32


def _bn_train(acc, gamma, beta, inv_nhw):
    """Training-mode BatchNorm with two-pass batch statistics (f32)."""
    mean = jnp.sum(acc, axis=0, keepdims=True) * inv_nhw
    centered = acc - mean
    var = jnp.sum(centered * centered, axis=0, keepdims=True) * inv_nhw
    return centered * (gamma * jax.lax.rsqrt(var + EPS)) + beta


# ------------------------------ fused residual kernel ------------------------------

def residual_kernel(x_ref, w1_ref, g1_ref, be1_ref, w2_ref, g2_ref, be2_ref,
                    out_ref, pad_ref):
    N, H, W, C = x_ref.shape
    Hp, Wp = H + 2, W + 2
    NHW = N * H * W
    inv_nhw = 1.0 / NHW

    xv = x_ref[...]                                   # (N, H, W, C) f32; also identity skip

    # ---- zero the 1-pixel halo ONCE (scratch is reused by both convs) ----
    zrow = jnp.zeros((N, 1, Wp, C), pad_ref.dtype)
    zcol = jnp.zeros((N, Hp, 1, C), pad_ref.dtype)
    pad_ref[:, 0:1, :, :] = zrow
    pad_ref[:, Hp - 1:Hp, :, :] = zrow
    pad_ref[:, :, 0:1, :] = zcol
    pad_ref[:, :, Wp - 1:Wp, :] = zcol

    # ---- conv1 (one im2col matmul) + bn1 (two-pass batch stats) + relu ----
    pad_ref[:, 1:1 + H, 1:1 + W, :] = xv
    acc1 = _im2col_matmul(pad_ref, w1_ref, N, H, W, C)
    # conv1 bias omitted: cancelled exactly by the training-mode BN mean subtraction.
    y = jnp.maximum(_bn_train(acc1, g1_ref[...], be1_ref[...], inv_nhw), 0.0)

    # ---- conv2: reuse the SAME padded scratch (halo already zero) ----
    pad_ref[:, 1:1 + H, 1:1 + W, :] = y.reshape(N, H, W, C)
    acc2 = _im2col_matmul(pad_ref, w2_ref, N, H, W, C)
    z = _bn_train(acc2, g2_ref[...], be2_ref[...], inv_nhw)   # conv2 bias also omitted

    # ---- identity skip (f32 x already in registers) + final relu ----
    out = jnp.maximum(z + xv.reshape(NHW, C), 0.0)
    out_ref[...] = out.reshape(N, H, W, C).astype(out_ref.dtype)


# ------------------------------ host-side wrappers ------------------------------

def prepare_params(params):
    """Hoisted, one-time weight re-layout/cast (review: don't redo per forward call).

    torch conv weight (Cout, Cin, 3, 3) -> (kh, kw, Cin, Cout) -> (9*Cin, Cout) bf16,
    row order matching the im2col tap order (dh outer, dw inner, Cin last).
    Conv biases b1/b2 are deliberately NOT passed: cancelled by training-mode BatchNorm.
    """
    def prep_w(w):
        cout, cin = w.shape[0], w.shape[1]
        return jnp.transpose(w, (2, 3, 1, 0)).reshape(9 * cin, cout).astype(jnp.bfloat16)

    C = params["w1"].shape[0]
    return {
        "w1k": prep_w(params["w1"]),
        "w2k": prep_w(params["w2"]),
        "g1": params["gamma1"].reshape(1, C).astype(jnp.float32),
        "be1": params["beta1"].reshape(1, C).astype(jnp.float32),
        "g2": params["gamma2"].reshape(1, C).astype(jnp.float32),
        "be2": params["beta2"].reshape(1, C).astype(jnp.float32),
    }


def _vmem_limit_bytes(N, H, W, C):
    """Footprint-derived scoped-VMEM limit (review: don't blanket-reserve 32 MiB)."""
    f32, bf16 = 4, 2
    act = N * H * W * C
    live = (act * f32                      # x input
            + act * f32                    # output
            + 2 * 9 * C * C * bf16         # both conv weights
            + N * (H + 2) * (W + 2) * C * f32   # padded scratch
            + 2 * act * 9 * bf16           # im2col slab + staged taps
            + 3 * act * f32)               # acc / centered / y temporaries
    return int(min(max(4 * live, 8 * 1024 * 1024), 64 * 1024 * 1024))


@jax.jit
def residual_forward_nhwc(x_nhwc, prepared):
    """NHWC-native forward (preferred: no layout plumbing around the kernel)."""
    N, H, W, C = x_nhwc.shape
    assert prepared["w1k"].shape == (9 * C, C), \
        "default config (use_1x1conv=False) requires input_channels == num_channels"

    vmem = pl.BlockSpec(memory_space=pltpu.MemorySpace.VMEM)
    return pl.pallas_call(
        residual_kernel,
        out_shape=jax.ShapeDtypeStruct((N, H, W, C), jnp.float32),
        in_specs=[vmem] * 7,
        out_specs=vmem,
        scratch_shapes=[pltpu.VMEM((N, H + 2, W + 2, C), jnp.float32)],
        compiler_params=pltpu.CompilerParams(
            vmem_limit_bytes=_vmem_limit_bytes(N, H, W, C)),
    )(x_nhwc, prepared["w1k"], prepared["g1"], prepared["be1"],
      prepared["w2k"], prepared["g2"], prepared["be2"])


def residual_forward_nchw(x_nchw, prepared):
    """Drop-in wrapper for the PyTorch module's NCHW layout (one transpose in/out).
    Prefer residual_forward_nhwc and keep the whole network in NHWC."""
    x = jnp.transpose(x_nchw, (0, 2, 3, 1))
    out = residual_forward_nhwc(x, prepared)
    return jnp.transpose(out, (0, 3, 1, 2))


# ------------------------------ references (NHWC, no layout plumbing) ------------------------------

def reference_forward_f32_nhwc(x, params):
    """Exact f32 module semantics (conv with bias, training-mode BN)."""
    dn = ("NHWC", "HWIO", "NHWC")

    def conv3x3(inp, w, b):
        w_hwio = jnp.transpose(w, (2, 3, 1, 0))
        y = jax.lax.conv_general_dilated(inp, w_hwio, (1, 1), "SAME", dimension_numbers=dn)
        return y + b.reshape(1, 1, 1, -1)

    def bn(y, g, b):
        mean = jnp.mean(y, axis=(0, 1, 2), keepdims=True)
        var = jnp.mean((y - mean) ** 2, axis=(0, 1, 2), keepdims=True)
        return (y - mean) * jax.lax.rsqrt(var + EPS) * g.reshape(1, 1, 1, -1) + b.reshape(1, 1, 1, -1)

    y = jax.nn.relu(bn(conv3x3(x, params["w1"], params["b1"]), params["gamma1"], params["beta1"]))
    y = bn(conv3x3(y, params["w2"], params["b2"]), params["gamma2"], params["beta2"])
    return jax.nn.relu(y + x)


def reference_forward_bf16_nhwc(x, params):
    """Matches kernel numerics: bf16 conv operands, f32 accumulation, no conv bias
    (bias cancelled by training-mode BN), two-pass batch stats, f32 skip."""
    dn = ("NHWC", "HWIO", "NHWC")

    def conv3x3(inp, w):
        w_hwio = jnp.transpose(w, (2, 3, 1, 0)).astype(jnp.bfloat16)
        return jax.lax.conv_general_dilated(
            inp.astype(jnp.bfloat16), w_hwio, (1, 1), "SAME",
            dimension_numbers=dn, preferred_element_type=jnp.float32)

    def bn(y, g, b):
        mean = jnp.mean(y, axis=(0, 1, 2), keepdims=True)
        var = jnp.mean((y - mean) ** 2, axis=(0, 1, 2), keepdims=True)
        return (y - mean) * jax.lax.rsqrt(var + EPS) * g.reshape(1, 1, 1, -1) + b.reshape(1, 1, 1, -1)

    y = jax.nn.relu(bn(conv3x3(x, params["w1"]), params["gamma1"], params["beta1"]))
    y = bn(conv3x3(y, params["w2"]), params["gamma2"], params["beta2"])
    return jax.nn.relu(y + x)


def init_params(key, input_channels, num_channels):
    ks = jax.random.split(key, 6)
    w1 = 0.1 * jax.random.normal(ks[0], (num_channels, input_channels, 3, 3), jnp.float32)
    b1 = 0.1 * jax.random.normal(ks[1], (num_channels,), jnp.float32)
    w2 = 0.1 * jax.random.normal(ks[2], (num_channels, num_channels, 3, 3), jnp.float32)
    b2 = 0.1 * jax.random.normal(ks[3], (num_channels,), jnp.float32)
    return {
        "w1": w1, "b1": b1, "w2": w2, "b2": b2,
        # Randomized affine BN params (still valid module semantics) to exercise gamma/beta.
        "gamma1": 1.0 + 0.1 * jax.random.normal(ks[4], (num_channels,), jnp.float32),
        "beta1": 0.1 * jax.random.normal(ks[5], (num_channels,), jnp.float32),
        "gamma2": 1.0 - 0.1 * jax.random.normal(ks[4], (num_channels,), jnp.float32),
        "beta2": -0.1 * jax.random.normal(ks[5], (num_channels,), jnp.float32),
    }


if __name__ == "__main__":
    key = jax.random.PRNGKey(0)
    k_x, k_p = jax.random.split(key)

    # Small but ResNet-representative shapes: C = 128 keeps the channel axis fully lane-dense,
    # input_channels == num_channels as the default module config requires.
    N, C, H, W = 2, 128, 8, 8

    # NHWC end-to-end: the kernel is NHWC-native, no NCHW<->NHWC HBM round trips, no jnp.pad.
    x_nhwc = jax.random.normal(k_x, (N, H, W, C), jnp.float32)
    params = init_params(k_p, input_channels=C, num_channels=C)
    prepared = prepare_params(params)        # one-time weight re-layout / bf16 cast

    out = jax.block_until_ready(residual_forward_nhwc(x_nhwc, prepared))
    assert out.shape == (N, H, W, C)

    # Tight check against a reference with identical numerics (bf16 matmul operands, f32 accum,
    # two-pass BN stats): validates weight layout, in-kernel padding, im2col, BN, skip.
    ref16 = jax.block_until_ready(reference_forward_bf16_nhwc(x_nhwc, params))
    err_impl = float(jnp.max(jnp.abs(out - ref16)))
    assert jnp.allclose(out, ref16, rtol=2e-3, atol=2e-3), err_impl

    # Loose check against exact f32 module semantics (difference is only bf16 MXU operands).
    ref32 = jax.block_until_ready(reference_forward_f32_nhwc(x_nhwc, params))
    err_sem = float(jnp.max(jnp.abs(out - ref32)))
    assert jnp.allclose(out, ref32, rtol=1e-1, atol=1e-1), err_sem

    # NCHW drop-in wrapper (PyTorch module layout) gives the same result.
    x_nchw = jnp.transpose(x_nhwc, (0, 3, 1, 2))
    out_nchw = jax.block_until_ready(residual_forward_nchw(x_nchw, prepared))
    assert jnp.allclose(out_nchw, jnp.transpose(out, (0, 3, 1, 2)))

    print("KERNEL_OK")
</pallas_src>

<mosaic_0001>
module attributes {stable_mosaic.version = 11 : i64} {
  func.func @residual_kernel(%arg0: memref<2x8x8x128xf32, #tpu.memory_space<vmem>>, %arg1: memref<1152x128xbf16, #tpu.memory_space<vmem>>, %arg2: memref<1x128xf32, #tpu.memory_space<vmem>>, %arg3: memref<1x128xf32, #tpu.memory_space<vmem>>, %arg4: memref<1152x128xbf16, #tpu.memory_space<vmem>>, %arg5: memref<1x128xf32, #tpu.memory_space<vmem>>, %arg6: memref<1x128xf32, #tpu.memory_space<vmem>>, %arg7: memref<2x8x8x128xf32, #tpu.memory_space<vmem>>, %arg8: memref<2x10x10x128xf32, #tpu.memory_space<vmem>>) attributes {dimension_semantics = [], scalar_prefetch = 0 : i64, scratch_operands = 1 : i64, tpu.core_type = #tpu.core_type<tc>} {
    %c0 = arith.constant 0 : index
    %c0_0 = arith.constant 0 : index
    %c0_1 = arith.constant 0 : index
    %c0_2 = arith.constant 0 : index
    %0 = vector.load %arg0[%c0, %c0_0, %c0_1, %c0_2] : memref<2x8x8x128xf32, #tpu.memory_space<vmem>>, vector<2x8x8x128xf32>
    %cst = arith.constant 0.000000e+00 : f32
    %1 = vector.broadcast %cst : f32 to vector<2x1x10x128xf32>
    %cst_3 = arith.constant 0.000000e+00 : f32
    %2 = vector.broadcast %cst_3 : f32 to vector<2x10x1x128xf32>
    %c0_4 = arith.constant 0 : index
    %c0_5 = arith.constant 0 : index
    %c0_6 = arith.constant 0 : index
    %c0_7 = arith.constant 0 : index
    %3 = vector.load %arg8[%c0_4, %c0_5, %c0_6, %c0_7] : memref<2x10x10x128xf32, #tpu.memory_space<vmem>>, vector<2x1x10x128xf32>
    tpu.vector_store %arg8[%c0_4, %c0_5, %c0_6, %c0_7], %1 {strides = array<i32>} : memref<2x10x10x128xf32, #tpu.memory_space<vmem>>, vector<2x1x10x128xf32>,
    %c0_8 = arith.constant 0 : index
    %c9 = arith.constant 9 : index
    %c0_9 = arith.constant 0 : index
    %c0_10 = arith.constant 0 : index
    %4 = vector.load %arg8[%c0_8, %c9, %c0_9, %c0_10] : memref<2x10x10x128xf32, #tpu.memory_space<vmem>>, vector<2x1x10x128xf32>
    tpu.vector_store %arg8[%c0_8, %c9, %c0_9, %c0_10], %1 {strides = array<i32>} : memref<2x10x10x128xf32, #tpu.memory_space<vmem>>, vector<2x1x10x128xf32>,
    %c0_11 = arith.constant 0 : index
    %c0_12 = arith.constant 0 : index
    %c0_13 = arith.constant 0 : index
    %c0_14 = arith.constant 0 : index
    %5 = vector.load %arg8[%c0_11, %c0_12, %c0_13, %c0_14] : memref<2x10x10x128xf32, #tpu.memory_space<vmem>>, vector<2x10x1x128xf32>
    tpu.vector_store %arg8[%c0_11, %c0_12, %c0_13, %c0_14], %2 {strides = array<i32>} : memref<2x10x10x128xf32, #tpu.memory_space<vmem>>, vector<2x10x1x128xf32>,
    %c0_15 = arith.constant 0 : index
    %c0_16 = arith.constant 0 : index
    %c9_17 = arith.constant 9 : index
    %c0_18 = arith.constant 0 : index
    %6 = vector.load %arg8[%c0_15, %c0_16, %c9_17, %c0_18] : memref<2x10x10x128xf32, #tpu.memory_space<vmem>>, vector<2x10x1x128xf32>
    tpu.vector_store %arg8[%c0_15, %c0_16, %c9_17, %c0_18], %2 {strides = array<i32>} : memref<2x10x10x128xf32, #tpu.memory_space<vmem>>, vector<2x10x1x128xf32>,
    %c0_19 = arith.constant 0 : index
    %c1 = arith.constant 1 : index
    %c1_20 = arith.constant 1 : index
    %c0_21 = arith.constant 0 : index
    %7 = vector.load %arg8[%c0_19, %c1, %c1_20, %c0_21] : memref<2x10x10x128xf32, #tpu.memory_space<vmem>>, vector<2x8x8x128xf32>
    tpu.vector_store %arg8[%c0_19, %c1, %c1_20, %c0_21], %0 {strides = array<i32>} : memref<2x10x10x128xf32, #tpu.memory_space<vmem>>, vector<2x8x8x128xf32>,
    %c0_22 = arith.constant 0 : index
    %c0_23 = arith.constant 0 : index
    %c0_24 = arith.constant 0 : index
    %c0_25 = arith.constant 0 : index
    %8 = vector.load %arg8[%c0_22, %c0_23, %c0_24, %c0_25] : memref<2x10x10x128xf32, #tpu.memory_space<vmem>>, vector<2x10x8x128xf32>
    %c0_26 = arith.constant 0 : index
    %c0_27 = arith.constant 0 : index
    %c1_28 = arith.constant 1 : index
    %c0_29 = arith.constant 0 : index
    %9 = vector.load %arg8[%c0_26, %c0_27, %c1_28, %c0_29] : memref<2x10x10x128xf32, #tpu.memory_space<vmem>>, vector<2x10x8x128xf32>
    %c0_30 = arith.constant 0 : index
    %c0_31 = arith.constant 0 : index
    %c2 = arith.constant 2 : index
    %c0_32 = arith.constant 0 : index
    %10 = vector.load %arg8[%c0_30, %c0_31, %c2, %c0_32] : memref<2x10x10x128xf32, #tpu.memory_space<vmem>>, vector<2x10x8x128xf32>
    %11 = vector.extract_strided_slice %8 {offsets = [0, 0, 0, 0], sizes = [2, 8, 8, 128], strides = [1, 1, 1, 1]} : vector<2x10x8x128xf32> to vector<2x8x8x128xf32>
    %12 = vector.shape_cast %11 : vector<2x8x8x128xf32> to vector<128x128xf32>
    %13 = arith.truncf %12 : vector<128x128xf32> to vector<128x128xbf16>
    %14 = vector.extract_strided_slice %9 {offsets = [0, 0, 0, 0], sizes = [2, 8, 8, 128], strides = [1, 1, 1, 1]} : vector<2x10x8x128xf32> to vector<2x8x8x128xf32>
    %15 = vector.shape_cast %14 : vector<2x8x8x128xf32> to vector<128x128xf32>
    %16 = arith.truncf %15 : vector<128x128xf32> to vector<128x128xbf16>
    %17 = vector.extract_strided_slice %10 {offsets = [0, 0, 0, 0], sizes = [2, 8, 8, 128], strides = [1, 1, 1, 1]} : vector<2x10x8x128xf32> to vector<2x8x8x128xf32>
    %18 = vector.shape_cast %17 : vector<2x8x8x128xf32> to vector<128x128xf32>
    %19 = arith.truncf %18 : vector<128x128xf32> to vector<128x128xbf16>
    %20 = vector.extract_strided_slice %8 {offsets = [0, 1, 0, 0], sizes = [2, 8, 8, 128], strides = [1, 1, 1, 1]} : vector<2x10x8x128xf32> to vector<2x8x8x128xf32>
    %21 = vector.shape_cast %20 : vector<2x8x8x128xf32> to vector<128x128xf32>
    %22 = arith.truncf %21 : vector<128x128xf32> to vector<128x128xbf16>
    %23 = vector.extract_strided_slice %9 {offsets = [0, 1, 0, 0], sizes = [2, 8, 8, 128], strides = [1, 1, 1, 1]} : vector<2x10x8x128xf32> to vector<2x8x8x128xf32>
    %24 = vector.shape_cast %23 : vector<2x8x8x128xf32> to vector<128x128xf32>
    %25 = arith.truncf %24 : vector<128x128xf32> to vector<128x128xbf16>
    %26 = vector.extract_strided_slice %10 {offsets = [0, 1, 0, 0], sizes = [2, 8, 8, 128], strides = [1, 1, 1, 1]} : vector<2x10x8x128xf32> to vector<2x8x8x128xf32>
    %27 = vector.shape_cast %26 : vector<2x8x8x128xf32> to vector<128x128xf32>
    %28 = arith.truncf %27 : vector<128x128xf32> to vector<128x128xbf16>
    %29 = vector.extract_strided_slice %8 {offsets = [0, 2, 0, 0], sizes = [2, 8, 8, 128], strides = [1, 1, 1, 1]} : vector<2x10x8x128xf32> to vector<2x8x8x128xf32>
    %30 = vector.shape_cast %29 : vector<2x8x8x128xf32> to vector<128x128xf32>
    %31 = arith.truncf %30 : vector<128x128xf32> to vector<128x128xbf16>
    %32 = vector.extract_strided_slice %9 {offsets = [0, 2, 0, 0], sizes = [2, 8, 8, 128], strides = [1, 1, 1, 1]} : vector<2x10x8x128xf32> to vector<2x8x8x128xf32>
    %33 = vector.shape_cast %32 : vector<2x8x8x128xf32> to vector<128x128xf32>
    %34 = arith.truncf %33 : vector<128x128xf32> to vector<128x128xbf16>
    %35 = vector.extract_strided_slice %10 {offsets = [0, 2, 0, 0], sizes = [2, 8, 8, 128], strides = [1, 1, 1, 1]} : vector<2x10x8x128xf32> to vector<2x8x8x128xf32>
    %36 = vector.shape_cast %35 : vector<2x8x8x128xf32> to vector<128x128xf32>
    %37 = arith.truncf %36 : vector<128x128xf32> to vector<128x128xbf16>
    %38 = tpu.concatenate %13, %16, %19, %22, %25, %28, %31, %34, %37 in 1 : vector<128x128xbf16>, vector<128x128xbf16>, vector<128x128xbf16>, vector<128x128xbf16>, vector<128x128xbf16>, vector<128x128xbf16>, vector<128x128xbf16>, vector<128x128xbf16>, vector<128x128xbf16> -> vector<128x1152xbf16>
    %c0_33 = arith.constant 0 : index
    %c0_34 = arith.constant 0 : index
    %39 = vector.load %arg1[%c0_33, %c0_34] : memref<1152x128xbf16, #tpu.memory_space<vmem>>, vector<1152x128xbf16>
    %cst_35 = arith.constant dense<0.000000e+00> : vector<128x128xf32>
    %40 = tpu.matmul %38, %39, %cst_35 {dimension_numbers = #tpu.dot_dimension_numbers<[1], [0], [0], [1], [0, 0, 1, 1], [], []>} : vector<128x1152xbf16>, vector<1152x128xbf16>, vector<128x128xf32> -> vector<128x128xf32>
    %c0_36 = arith.constant 0 : index
    %c0_37 = arith.constant 0 : index
    %41 = vector.load %arg2[%c0_36, %c0_37] : memref<1x128xf32, #tpu.memory_space<vmem>>, vector<1x128xf32>
    %c0_38 = arith.constant 0 : index
    %c0_39 = arith.constant 0 : index
    %42 = vector.load %arg3[%c0_38, %c0_39] : memref<1x128xf32, #tpu.memory_space<vmem>>, vector<1x128xf32>
    %cst_40 = arith.constant dense<0.000000e+00> : vector<128xf32>
    %43 = vector.multi_reduction <add>, %40, %cst_40 [0] : vector<128x128xf32> to vector<128xf32>
    %44 = vector.shape_cast %43 : vector<128xf32> to vector<1x128xf32>
    %cst_41 = arith.constant 7.812500e-03 : f32
    %45 = vector.broadcast %cst_41 : f32 to vector<1x128xf32>
    %46 = arith.mulf %44, %45 : vector<1x128xf32>
    %47 = vector.broadcast %46 : vector<1x128xf32> to vector<128x128xf32>
    %48 = arith.subf %40, %47 : vector<128x128xf32>
    %49 = arith.mulf %48, %48 : vector<128x128xf32>
    %cst_42 = arith.constant dense<0.000000e+00> : vector<128xf32>
    %50 = vector.multi_reduction <add>, %49, %cst_42 [0] : vector<128x128xf32> to vector<128xf32>
    %51 = vector.shape_cast %50 : vector<128xf32> to vector<1x128xf32>
    %cst_43 = arith.constant 7.812500e-03 : f32
    %52 = vector.broadcast %cst_43 : f32 to vector<1x128xf32>
    %53 = arith.mulf %51, %52 : vector<1x128xf32>
    %cst_44 = arith.constant 9.99999974E-6 : f32
    %54 = vector.broadcast %cst_44 : f32 to vector<1x128xf32>
    %55 = arith.addf %53, %54 : vector<1x128xf32>
    %56 = math.rsqrt %55 : vector<1x128xf32>
    %57 = arith.mulf %41, %56 : vector<1x128xf32>
    %58 = vector.broadcast %57 : vector<1x128xf32> to vector<128x128xf32>
    %59 = arith.mulf %48, %58 : vector<128x128xf32>
    %60 = vector.broadcast %42 : vector<1x128xf32> to vector<128x128xf32>
    %61 = arith.addf %59, %60 : vector<128x128xf32>
    %cst_45 = arith.constant 0.000000e+00 : f32
    %62 = vector.broadcast %cst_45 : f32 to vector<128x128xf32>
    %63 = arith.maximumf %61, %62 : vector<128x128xf32>
    %64 = vector.shape_cast %63 : vector<128x128xf32> to vector<2x8x8x128xf32>
    %c0_46 = arith.constant 0 : index
    %c1_47 = arith.constant 1 : index
    %c1_48 = arith.constant 1 : index
    %c0_49 = arith.constant 0 : index
    %65 = vector.load %arg8[%c0_46, %c1_47, %c1_48, %c0_49] : memref<2x10x10x128xf32, #tpu.memory_space<vmem>>, vector<2x8x8x128xf32>
    tpu.vector_store %arg8[%c0_46, %c1_47, %c1_48, %c0_49], %64 {strides = array<i32>} : memref<2x10x10x128xf32, #tpu.memory_space<vmem>>, vector<2x8x8x128xf32>,
    %c0_50 = arith.constant 0 : index
    %c0_51 = arith.constant 0 : index
    %c0_52 = arith.constant 0 : index
    %c0_53 = arith.constant 0 : index
    %66 = vector.load %arg8[%c0_50, %c0_51, %c0_52, %c0_53] : memref<2x10x10x128xf32, #tpu.memory_space<vmem>>, vector<2x10x8x128xf32>
    %c0_54 = arith.constant 0 : index
    %c0_55 = arith.constant 0 : index
    %c1_56 = arith.constant 1 : index
    %c0_57 = arith.constant 0 : index
    %67 = vector.load %arg8[%c0_54, %c0_55, %c1_56, %c0_57] : memref<2x10x10x128xf32, #tpu.memory_space<vmem>>, vector<2x10x8x128xf32>
    %c0_58 = arith.constant 0 : index
    %c0_59 = arith.constant 0 : index
    %c2_60 = arith.constant 2 : index
    %c0_61 = arith.constant 0 : index
    %68 = vector.load %arg8[%c0_58, %c0_59, %c2_60, %c0_61] : memref<2x10x10x128xf32, #tpu.memory_space<vmem>>, vector<2x10x8x128xf32>
    %69 = vector.extract_strided_slice %66 {offsets = [0, 0, 0, 0], sizes = [2, 8, 8, 128], strides = [1, 1, 1, 1]} : vector<2x10x8x128xf32> to vector<2x8x8x128xf32>
    %70 = vector.shape_cast %69 : vector<2x8x8x128xf32> to vector<128x128xf32>
    %71 = arith.truncf %70 : vector<128x128xf32> to vector<128x128xbf16>
    %72 = vector.extract_strided_slice %67 {offsets = [0, 0, 0, 0], sizes = [2, 8, 8, 128], strides = [1, 1, 1, 1]} : vector<2x10x8x128xf32> to vector<2x8x8x128xf32>
    %73 = vector.shape_cast %72 : vector<2x8x8x128xf32> to vector<128x128xf32>
    %74 = arith.truncf %73 : vector<128x128xf32> to vector<128x128xbf16>
    %75 = vector.extract_strided_slice %68 {offsets = [0, 0, 0, 0], sizes = [2, 8, 8, 128], strides = [1, 1, 1, 1]} : vector<2x10x8x128xf32> to vector<2x8x8x128xf32>
    %76 = vector.shape_cast %75 : vector<2x8x8x128xf32> to vector<128x128xf32>
    %77 = arith.truncf %76 : vector<128x128xf32> to vector<128x128xbf16>
    %78 = vector.extract_strided_slice %66 {offsets = [0, 1, 0, 0], sizes = [2, 8, 8, 128], strides = [1, 1, 1, 1]} : vector<2x10x8x128xf32> to vector<2x8x8x128xf32>
    %79 = vector.shape_cast %78 : vector<2x8x8x128xf32> to vector<128x128xf32>
    %80 = arith.truncf %79 : vector<128x128xf32> to vector<128x128xbf16>
    %81 = vector.extract_strided_slice %67 {offsets = [0, 1, 0, 0], sizes = [2, 8, 8, 128], strides = [1, 1, 1, 1]} : vector<2x10x8x128xf32> to vector<2x8x8x128xf32>
    %82 = vector.shape_cast %81 : vector<2x8x8x128xf32> to vector<128x128xf32>
    %83 = arith.truncf %82 : vector<128x128xf32> to vector<128x128xbf16>
    %84 = vector.extract_strided_slice %68 {offsets = [0, 1, 0, 0], sizes = [2, 8, 8, 128], strides = [1, 1, 1, 1]} : vector<2x10x8x128xf32> to vector<2x8x8x128xf32>
    %85 = vector.shape_cast %84 : vector<2x8x8x128xf32> to vector<128x128xf32>
    %86 = arith.truncf %85 : vector<128x128xf32> to vector<128x128xbf16>
    %87 = vector.extract_strided_slice %66 {offsets = [0, 2, 0, 0], sizes = [2, 8, 8, 128], strides = [1, 1, 1, 1]} : vector<2x10x8x128xf32> to vector<2x8x8x128xf32>
    %88 = vector.shape_cast %87 : vector<2x8x8x128xf32> to vector<128x128xf32>
    %89 = arith.truncf %88 : vector<128x128xf32> to vector<128x128xbf16>
    %90 = vector.extract_strided_slice %67 {offsets = [0, 2, 0, 0], sizes = [2, 8, 8, 128], strides = [1, 1, 1, 1]} : vector<2x10x8x128xf32> to vector<2x8x8x128xf32>
    %91 = vector.shape_cast %90 : vector<2x8x8x128xf32> to vector<128x128xf32>
    %92 = arith.truncf %91 : vector<128x128xf32> to vector<128x128xbf16>
    %93 = vector.extract_strided_slice %68 {offsets = [0, 2, 0, 0], sizes = [2, 8, 8, 128], strides = [1, 1, 1, 1]} : vector<2x10x8x128xf32> to vector<2x8x8x128xf32>
    %94 = vector.shape_cast %93 : vector<2x8x8x128xf32> to vector<128x128xf32>
    %95 = arith.truncf %94 : vector<128x128xf32> to vector<128x128xbf16>
    %96 = tpu.concatenate %71, %74, %77, %80, %83, %86, %89, %92, %95 in 1 : vector<128x128xbf16>, vector<128x128xbf16>, vector<128x128xbf16>, vector<128x128xbf16>, vector<128x128xbf16>, vector<128x128xbf16>, vector<128x128xbf16>, vector<128x128xbf16>, vector<128x128xbf16> -> vector<128x1152xbf16>
    %c0_62 = arith.constant 0 : index
    %c0_63 = arith.constant 0 : index
    %97 = vector.load %arg4[%c0_62, %c0_63] : memref<1152x128xbf16, #tpu.memory_space<vmem>>, vector<1152x128xbf16>
    %cst_64 = arith.constant dense<0.000000e+00> : vector<128x128xf32>
    %98 = tpu.matmul %96, %97, %cst_64 {dimension_numbers = #tpu.dot_dimension_numbers<[1], [0], [0], [1], [0, 0, 1, 1], [], []>} : vector<128x1152xbf16>, vector<1152x128xbf16>, vector<128x128xf32> -> vector<128x128xf32>
    %c0_65 = arith.constant 0 : index
    %c0_66 = arith.constant 0 : index
    %99 = vector.load %arg5[%c0_65, %c0_66] : memref<1x128xf32, #tpu.memory_space<vmem>>, vector<1x128xf32>
    %c0_67 = arith.constant 0 : index
    %c0_68 = arith.constant 0 : index
    %100 = vector.load %arg6[%c0_67, %c0_68] : memref<1x128xf32, #tpu.memory_space<vmem>>, vector<1x128xf32>
    %cst_69 = arith.constant dense<0.000000e+00> : vector<128xf32>
    %101 = vector.multi_reduction <add>, %98, %cst_69 [0] : vector<128x128xf32> to vector<128xf32>
    %102 = vector.shape_cast %101 : vector<128xf32> to vector<1x128xf32>
    %cst_70 = arith.constant 7.812500e-03 : f32
    %103 = vector.broadcast %cst_70 : f32 to vector<1x128xf32>
    %104 = arith.mulf %102, %103 : vector<1x128xf32>
    %105 = vector.broadcast %104 : vector<1x128xf32> to vector<128x128xf32>
    %106 = arith.subf %98, %105 : vector<128x128xf32>
    %107 = arith.mulf %106, %106 : vector<128x128xf32>
    %cst_71 = arith.constant dense<0.000000e+00> : vector<128xf32>
    %108 = vector.multi_reduction <add>, %107, %cst_71 [0] : vector<128x128xf32> to vector<128xf32>
    %109 = vector.shape_cast %108 : vector<128xf32> to vector<1x128xf32>
    %cst_72 = arith.constant 7.812500e-03 : f32
    %110 = vector.broadcast %cst_72 : f32 to vector<1x128xf32>
    %111 = arith.mulf %109, %110 : vector<1x128xf32>
    %cst_73 = arith.constant 9.99999974E-6 : f32
    %112 = vector.broadcast %cst_73 : f32 to vector<1x128xf32>
    %113 = arith.addf %111, %112 : vector<1x128xf32>
    %114 = math.rsqrt %113 : vector<1x128xf32>
    %115 = arith.mulf %99, %114 : vector<1x128xf32>
    %116 = vector.broadcast %115 : vector<1x128xf32> to vector<128x128xf32>
    %117 = arith.mulf %106, %116 : vector<128x128xf32>
    %118 = vector.broadcast %100 : vector<1x128xf32> to vector<128x128xf32>
    %119 = arith.addf %117, %118 : vector<128x128xf32>
    %120 = vector.shape_cast %0 : vector<2x8x8x128xf32> to vector<128x128xf32>
    %121 = arith.addf %119, %120 : vector<128x128xf32>
    %cst_74 = arith.constant 0.000000e+00 : f32
    %122 = vector.broadcast %cst_74 : f32 to vector<128x128xf32>
    %123 = arith.maximumf %121, %122 : vector<128x128xf32>
    %124 = vector.shape_cast %123 : vector<128x128xf32> to vector<2x8x8x128xf32>
    %c0_75 = arith.constant 0 : index
    %c0_76 = arith.constant 0 : index
    %c0_77 = arith.constant 0 : index
    %c0_78 = arith.constant 0 : index
    %125 = vector.load %arg7[%c0_75, %c0_76, %c0_77, %c0_78] : memref<2x8x8x128xf32, #tpu.memory_space<vmem>>, vector<2x8x8x128xf32>
    tpu.vector_store %arg7[%c0_75, %c0_76, %c0_77, %c0_78], %124 {strides = array<i32>} : memref<2x8x8x128xf32, #tpu.memory_space<vmem>>, vector<2x8x8x128xf32>,
    return
  }
}

</mosaic_0001>

<llo_original>
// kernel: residual_forward_nhwc.1
$region0: #{residual_forward_nhwc.1}
  #allocation0 [shape = 'u32[]', space=smem, size = 0x4, offset = 0x4, fixed_abs, tag = 'smem constant byte address 0x4 - core index']
  #allocation1 [shape = 'u32[144,128]{1,0:T(1,128)}', space=vmem, size = 0x12000, scoped, tag = 'internal scratch']
  #allocation2 [shape = 'f32[2,10,10,128]{3,2,1,0:T(8,128)}', space=vmem, size = 0x28000, scoped, tag = 'scratch operand']
  %s0 = inlined_call_operand.hbm [shape: f32[2,8,8,128], index: 0, kind: input, shape index: {}]
  %s1 = inlined_call_operand.hbm [shape: bf16[1152,128], index: 1, kind: input, shape index: {}]
  %s2 = inlined_call_operand.vmem [shape: f32[1,128], index: 2, kind: input, shape index: {}]
  %s3 = inlined_call_operand.vmem [shape: f32[1,128], index: 3, kind: input, shape index: {}]
  %s4 = inlined_call_operand.hbm [shape: bf16[1152,128], index: 4, kind: input, shape index: {}]
  %s5 = inlined_call_operand.vmem [shape: f32[1,128], index: 5, kind: input, shape index: {}]
  %s6 = inlined_call_operand.vmem [shape: f32[1,128], index: 6, kind: input, shape index: {}]
  %s7 = inlined_call_operand.hbm [shape: f32[2,8,8,128], index: 7, kind: output, shape index: {}]
  %s8 = sld [smem:[#allocation0]]
  $region50: #{residual_forward_nhwc.1} parent=0
    _
  %s10 = ssub.s32 1, %s8
  %s11 = scalar_select 0, %s10, %s8
  $region1: #{residual_forward_nhwc.1} parent=0
    #allocation3 [shape = 'u8[65536]{0}', space=vmem, size = 0x10000, scoped, tag = 'input window, operand 0, single buffered']
    #allocation4 [shape = 's32[1]{0}', space=sflag, size = 0x4, scoped, tag = 'scoped memory for residual_forward_nhwc.1']
    #allocation5 [shape = 's32[1]{0}', space=sflag, size = 0x4, scoped, tag = 'scoped memory for residual_forward_nhwc.1']
    #allocation6 [shape = 'u8[294912]{0}', space=vmem, size = 0x48000, scoped, tag = 'input window, operand 1, single buffered']
    #allocation7 [shape = 's32[1]{0}', space=sflag, size = 0x4, scoped, tag = 'scoped memory for residual_forward_nhwc.1']
    #allocation8 [shape = 'u8[294912]{0}', space=vmem, size = 0x48000, scoped, tag = 'input window, operand 4, single buffered']
    #allocation9 [shape = 'u8[65536]{0}', space=vmem, size = 0x10000, scoped, tag = 'output window, operand 0, single buffered']
    %12 = vsyncpa [#allocation4], 0
    %13 = vsyncpa [#allocation7], 0
    %14 = vsyncpa [#allocation5], 0
    // Predicated region
    $region2: #{residual_forward_nhwc.1} parent=1 // pred_check
      _
    $region3: #{residual_forward_nhwc.1} parent=1 // pred_check_branch
      %16 = sbr.rel (0) target = $region5
    $region4: #{residual_forward_nhwc.1} parent=1 // pred_region
      %s18 = ssub.s32 2048, 2048
      %19 = vsyncadd [#allocation4], %s18
      %s20 = sshll.u32 [#allocation3], 4
      %s21 = int_to_ptr.vmem [resolvable:$true] %s20
      %26 = dma.hbm_to_vmem [thread:$0]  %s0, 2048, %s21, [#allocation4], 128, 128, 8
    $region5: #{residual_forward_nhwc.1} parent=1 // pred_fallthru
      _
    // Predicated region
    $region6: #{residual_forward_nhwc.1} parent=1 // pred_check
      _
    $region7: #{residual_forward_nhwc.1} parent=1 // pred_check_branch
      %28 = sbr.rel (0) target = $region9
    $region8: #{residual_forward_nhwc.1} parent=1 // pred_region
      %s30 = ssub.s32 9216, 9216
      %31 = vsyncadd [#allocation7], %s30
      %s32 = sshll.u32 [#allocation6], 4
      %s33 = int_to_ptr.vmem [resolvable:$true] %s32
      %38 = dma.hbm_to_vmem [thread:$0]  %s1, 9216, %s33, [#allocation7], 64, 64, 4
    $region9: #{residual_forward_nhwc.1} parent=1 // pred_fallthru
      _
    // Predicated region
    $region10: #{residual_forward_nhwc.1} parent=1 // pred_check
      _
    $region11: #{residual_forward_nhwc.1} parent=1 // pred_check_branch
      %40 = sbr.rel (0) target = $region13
    $region12: #{residual_forward_nhwc.1} parent=1 // pred_region
      _
    $region13: #{residual_forward_nhwc.1} parent=1 // pred_fallthru
      _
    // Predicated region
    $region14: #{residual_forward_nhwc.1} parent=1 // pred_check
      _
    $region15: #{residual_forward_nhwc.1} parent=1 // pred_check_branch
      %42 = sbr.rel (0) target = $region17
    $region16: #{residual_forward_nhwc.1} parent=1 // pred_region
      _
    $region17: #{residual_forward_nhwc.1} parent=1 // pred_fallthru
      _
    // Predicated region
    $region18: #{residual_forward_nhwc.1} parent=1 // pred_check
      _
    $region19: #{residual_forward_nhwc.1} parent=1 // pred_check_branch
      %44 = sbr.rel (0) target = $region21
    $region20: #{residual_forward_nhwc.1} parent=1 // pred_region
      %s46 = ssub.s32 9216, 9216
      %47 = vsyncadd [#allocation7], %s46
      %s48 = sshll.u32 [#allocation8], 4
      %s49 = int_to_ptr.vmem [resolvable:$true] %s48
      %54 = dma.hbm_to_vmem [thread:$0]  %s4, 9216, %s49, [#allocation7], 64, 64, 4
    $region21: #{residual_forward_nhwc.1} parent=1 // pred_fallthru
      _
    // Predicated region
    $region22: #{residual_forward_nhwc.1} parent=1 // pred_check
      _
    $region23: #{residual_forward_nhwc.1} parent=1 // pred_check_branch
      %56 = sbr.rel (0) target = $region25
    $region24: #{residual_forward_nhwc.1} parent=1 // pred_region
      _
    $region25: #{residual_forward_nhwc.1} parent=1 // pred_fallthru
      _
    // Predicated region
    $region26: #{residual_forward_nhwc.1} parent=1 // pred_check
      _
    $region27: #{residual_forward_nhwc.1} parent=1 // pred_check_branch
      %58 = sbr.rel (0) target = $region29
    $region28: #{residual_forward_nhwc.1} parent=1 // pred_region
      _
    $region29: #{residual_forward_nhwc.1} parent=1 // pred_fallthru
      _
    // Predicated region
    $region30: #{residual_forward_nhwc.1} parent=1 // pred_check
      _
    $region31: #{residual_forward_nhwc.1} parent=1 // pred_check_branch
      %60 = sbr.rel (0) target = $region33
    $region32: #{residual_forward_nhwc.1} parent=1 // pred_region
      %61 = dma.done [#allocation4], 2048
    $region33: #{residual_forward_nhwc.1} parent=1 // pred_fallthru
      _
    // Predicated region
    $region34: #{residual_forward_nhwc.1} parent=1 // pred_check
      _
    $region35: #{residual_forward_nhwc.1} parent=1 // pred_check_branch
      %63 = sbr.rel (0) target = $region37
    $region36: #{residual_forward_nhwc.1} parent=1 // pred_region
      %64 = dma.done [#allocation7], 9216
    $region37: #{residual_forward_nhwc.1} parent=1 // pred_fallthru
      _
    // Predicated region
    $region38: #{residual_forward_nhwc.1} parent=1 // pred_check
      _
    $region39: #{residual_forward_nhwc.1} parent=1 // pred_check_branch
      %66 = sbr.rel (0) target = $region41
    $region40: #{residual_forward_nhwc.1} parent=1 // pred_region
      %67 = dma.done [#allocation7], 9216
    $region41: #{residual_forward_nhwc.1} parent=1 // pred_fallthru
      _
    %v69 = vld [vmem:[#allocation3] sm:$0xff]
    %v70 = vld [vmem:[#allocation3 + $0x8] sm:$0xff]
    %v71 = vld [vmem:[#allocation3 + $0x10] sm:$0xff]
    %v72 = vld [vmem:[#allocation3 + $0x18] sm:$0xff]
    %v73 = vld [vmem:[#allocation3 + $0x20] sm:$0xff]
    %v74 = vld [vmem:[#allocation3 + $0x28] sm:$0xff]
    %v75 = vld [vmem:[#allocation3 + $0x30] sm:$0xff]
    %v76 = vld [vmem:[#allocation3 + $0x38] sm:$0xff]
    %v77 = vld [vmem:[#allocation3 + $0x40] sm:$0xff]
    %v78 = vld [vmem:[#allocation3 + $0x48] sm:$0xff]
    %v79 = vld [vmem:[#allocation3 + $0x50] sm:$0xff]
    %v80 = vld [vmem:[#allocation3 + $0x58] sm:$0xff]
    %v81 = vld [vmem:[#allocation3 + $0x60] sm:$0xff]
    %v82 = vld [vmem:[#allocation3 + $0x68] sm:$0xff]
    %v83 = vld [vmem:[#allocation3 + $0x70] sm:$0xff]
    %v84 = vld [vmem:[#allocation3 + $0x78] sm:$0xff]
    %85 = vst [vmem:[#allocation2] sm:$0xff] 0.0
    %86 = vst [vmem:[#allocation2 + $0x8] sm:$0x3] 0.0
    %87 = vst [vmem:[#allocation2 + $0xa0] sm:$0xff] 0.0
    %88 = vst [vmem:[#allocation2 + $0xa8] sm:$0x3] 0.0
    %s89 = scalar_lea.vmem [#allocation2], 144
    %90 = vst [vmem:[%s89] sm:$0xff] 0.0
    %91 = vst [vmem:[%s89 + $0x8] sm:$0x3] 0.0
    %92 = vst [vmem:[%s89 + $0xa0] sm:$0xff] 0.0
    %93 = vst [vmem:[%s89 + $0xa8] sm:$0x3] 0.0
    %94 = vst [vmem:[#allocation2] sm:$0x1] 0.0
    %95 = vst [vmem:[#allocation2 + $0x10] sm:$0x1] 0.0
    %96 = vst [vmem:[#allocation2 + $0x20] sm:$0x1] 0.0
    %97 = vst [vmem:[#allocation2 + $0x30] sm:$0x1] 0.0
    %98 = vst [vmem:[#allocation2 + $0x40] sm:$0x1] 0.0
    %99 = vst [vmem:[#allocation2 + $0x50] sm:$0x1] 0.0
    %100 = vst [vmem:[#allocation2 + $0x60] sm:$0x1] 0.0
    %101 = vst [vmem:[#allocation2 + $0x70] sm:$0x1] 0.0
    %102 = vst [vmem:[#allocation2 + $0x80] sm:$0x1] 0.0
    %103 = vst [vmem:[#allocation2 + $0x90] sm:$0x1] 0.0
    %104 = vst [vmem:[#allocation2 + $0xa0] sm:$0x1] 0.0
    %105 = vst [vmem:[#allocation2 + $0xb0] sm:$0x1] 0.0
    %106 = vst [vmem:[#allocation2 + $0xc0] sm:$0x1] 0.0
    %107 = vst [vmem:[#allocation2 + $0xd0] sm:$0x1] 0.0
    %108 = vst [vmem:[#allocation2 + $0xe0] sm:$0x1] 0.0
    %109 = vst [vmem:[#allocation2 + $0xf0] sm:$0x1] 0.0
    %110 = vst [vmem:[#allocation2 + $0x100] sm:$0x1] 0.0
    %111 = vst [vmem:[#allocation2 + $0x110] sm:$0x1] 0.0
    %112 = vst [vmem:[#allocation2 + $0x120] sm:$0x1] 0.0
    %113 = vst [vmem:[#allocation2 + $0x130] sm:$0x1] 0.0
    %114 = vst [vmem:[#allocation2 + $0x9] sm:$0x1] 0.0
    %115 = vst [vmem:[#allocation2 + $0x19] sm:$0x1] 0.0
    %116 = vst [vmem:[#allocation2 + $0x29] sm:$0x1] 0.0
    %117 = vst [vmem:[#allocation2 + $0x39] sm:$0x1] 0.0
    %118 = vst [vmem:[#allocation2 + $0x49] sm:$0x1] 0.0
    %119 = vst [vmem:[#allocation2 + $0x59] sm:$0x1] 0.0
    %120 = vst [vmem:[#allocation2 + $0x69] sm:$0x1] 0.0
    %121 = vst [vmem:[#allocation2 + $0x79] sm:$0x1] 0.0
    %122 = vst [vmem:[#allocation2 + $0x89] sm:$0x1] 0.0
    %123 = vst [vmem:[#allocation2 + $0x99] sm:$0x1] 0.0
    %124 = vst [vmem:[#allocation2 + $0xa9] sm:$0x1] 0.0
    %125 = vst [vmem:[#allocation2 + $0xb9] sm:$0x1] 0.0
    %126 = vst [vmem:[#allocation2 + $0xc9] sm:$0x1] 0.0
    %127 = vst [vmem:[#allocation2 + $0xd9] sm:$0x1] 0.0
    %128 = vst [vmem:[#allocation2 + $0xe9] sm:$0x1] 0.0
    %129 = vst [vmem:[#allocation2 + $0xf9] sm:$0x1] 0.0
    %130 = vst [vmem:[#allocation2 + $0x109] sm:$0x1] 0.0
    %131 = vst [vmem:[#allocation2 + $0x119] sm:$0x1] 0.0
    %132 = vst [vmem:[#allocation2 + $0x129] sm:$0x1] 0.0
    %133 = vst [vmem:[#allocation2 + $0x139] sm:$0x1] 0.0
    %s134 = scalar_lea.vmem [#allocation2], 16
    %135 = vst [vmem:[%s134 + $0x1] sm:$0xff] %v69
    %136 = vst [vmem:[%s134 + $0x11] sm:$0xff] %v70
    %137 = vst [vmem:[%s134 + $0x21] sm:$0xff] %v71
    %138 = vst [vmem:[%s134 + $0x31] sm:$0xff] %v72
    %139 = vst [vmem:[%s134 + $0x41] sm:$0xff] %v73
    %140 = vst [vmem:[%s134 + $0x51] sm:$0xff] %v74
    %141 = vst [vmem:[%s134 + $0x61] sm:$0xff] %v75
    %142 = vst [vmem:[%s134 + $0x71] sm:$0xff] %v76
    %143 = vst [vmem:[%s134 + $0xa1] sm:$0xff] %v77
    %144 = vst [vmem:[%s134 + $0xb1] sm:$0xff] %v78
    %145 = vst [vmem:[%s134 + $0xc1] sm:$0xff] %v79
    %146 = vst [vmem:[%s134 + $0xd1] sm:$0xff] %v80
    %147 = vst [vmem:[%s134 + $0xe1] sm:$0xff] %v81
    %148 = vst [vmem:[%s134 + $0xf1] sm:$0xff] %v82
    %149 = vst [vmem:[%s134 + $0x101] sm:$0xff] %v83
    %150 = vst [vmem:[%s134 + $0x111] sm:$0xff] %v84
    %v151 = vld [vmem:[#allocation2] sm:$0xff]
    %v152 = vld [vmem:[#allocation2 + $0x10] sm:$0xff]
    %v153 = vld [vmem:[#allocation2 + $0x20] sm:$0xff]
    %v154 = vld [vmem:[#allocation2 + $0x30] sm:$0xff]
    %v155 = vld [vmem:[#allocation2 + $0x40] sm:$0xff]
    %v156 = vld [vmem:[#allocation2 + $0x50] sm:$0xff]
    %v157 = vld [vmem:[#allocation2 + $0x60] sm:$0xff]
    %v158 = vld [vmem:[#allocation2 + $0x70] sm:$0xff]
    %v159 = vld [vmem:[#allocation2 + $0x80] sm:$0xff]
    %v160 = vld [vmem:[#allocation2 + $0x90] sm:$0xff]
    %v161 = vld [vmem:[#allocation2 + $0xa0] sm:$0xff]
    %v162 = vld [vmem:[#allocation2 + $0xb0] sm:$0xff]
    %v163 = vld [vmem:[#allocation2 + $0xc0] sm:$0xff]
    %v164 = vld [vmem:[#allocation2 + $0xd0] sm:$0xff]
    %v165 = vld [vmem:[#allocation2 + $0xe0] sm:$0xff]
    %v166 = vld [vmem:[#allocation2 + $0xf0] sm:$0xff]
    %v167 = vld [vmem:[#allocation2 + $0x100] sm:$0xff]
    %v168 = vld [vmem:[#allocation2 + $0x110] sm:$0xff]
    %v169 = vld [vmem:[#allocation2 + $0x120] sm:$0xff]
    %v170 = vld [vmem:[#allocation2 + $0x130] sm:$0xff]
    %v171 = vld [vmem:[#allocation2 + $0x1] sm:$0xff]
    %v172 = vld [vmem:[#allocation2 + $0x11] sm:$0xff]
    %v173 = vld [vmem:[#allocation2 + $0x21] sm:$0xff]
    %v174 = vld [vmem:[#allocation2 + $0x31] sm:$0xff]
    %v175 = vld [vmem:[#allocation2 + $0x41] sm:$0xff]
    %v176 = vld [vmem:[#allocation2 + $0x51] sm:$0xff]
    %v177 = vld [vmem:[#allocation2 + $0x61] sm:$0xff]
    %v178 = vld [vmem:[#allocation2 + $0x71] sm:$0xff]
    %v179 = vld [vmem:[#allocation2 + $0x81] sm:$0xff]
    %v180 = vld [vmem:[#allocation2 + $0x91] sm:$0xff]
    %v181 = vld [vmem:[#allocation2 + $0xa1] sm:$0xff]
    %v182 = vld [vmem:[#allocation2 + $0xb1] sm:$0xff]
    %v183 = vld [vmem:[#allocation2 + $0xc1] sm:$0xff]
    %v184 = vld [vmem:[#allocation2 + $0xd1] sm:$0xff]
    %v185 = vld [vmem:[#allocation2 + $0xe1] sm:$0xff]
    %v186 = vld [vmem:[#allocation2 + $0xf1] sm:$0xff]
    %v187 = vld [vmem:[#allocation2 + $0x101] sm:$0xff]
    %v188 = vld [vmem:[#allocation2 + $0x111] sm:$0xff]
    %v189 = vld [vmem:[#allocation2 + $0x121] sm:$0xff]
    %v190 = vld [vmem:[#allocation2 + $0x131] sm:$0xff]
    %v191 = vld [vmem:[#allocation2 + $0x2] sm:$0xff]
    %v192 = vld [vmem:[#allocation2 + $0x12] sm:$0xff]
    %v193 = vld [vmem:[#allocation2 + $0x22] sm:$0xff]
    %v194 = vld [vmem:[#allocation2 + $0x32] sm:$0xff]
    %v195 = vld [vmem:[#allocation2 + $0x42] sm:$0xff]
    %v196 = vld [vmem:[#allocation2 + $0x52] sm:$0xff]
    %v197 = vld [vmem:[#allocation2 + $0x62] sm:$0xff]
    %v198 = vld [vmem:[#allocation2 + $0x72] sm:$0xff]
    %v199 = vld [vmem:[#allocation2 + $0x82] sm:$0xff]
    %v200 = vld [vmem:[#allocation2 + $0x92] sm:$0xff]
    %v201 = vld [vmem:[#allocation2 + $0xa2] sm:$0xff]
    %v202 = vld [vmem:[#allocation2 + $0xb2] sm:$0xff]
    %v203 = vld [vmem:[#allocation2 + $0xc2] sm:$0xff]
    %v204 = vld [vmem:[#allocation2 + $0xd2] sm:$0xff]
    %v205 = vld [vmem:[#allocation2 + $0xe2] sm:$0xff]
    %v206 = vld [vmem:[#allocation2 + $0xf2] sm:$0xff]
    %v207 = vld [vmem:[#allocation2 + $0x102] sm:$0xff]
    %v208 = vld [vmem:[#allocation2 + $0x112] sm:$0xff]
    %v209 = vld [vmem:[#allocation2 + $0x122] sm:$0xff]
    %v210 = vld [vmem:[#allocation2 + $0x132] sm:$0xff]
    %v211 = vpack.c.bf16 %v152, %v151
    %v212 = vpack.c.bf16 %v154, %v153
    %v213 = vpack.c.bf16 %v156, %v155
    %v214 = vpack.c.bf16 %v158, %v157
    %v215 = vpack.c.bf16 %v162, %v161
    %v216 = vpack.c.bf16 %v164, %v163
    %v217 = vpack.c.bf16 %v166, %v165
    %v218 = vpack.c.bf16 %v168, %v167
    %v219 = vpack.c.bf16 %v172, %v171
    %v220 = vpack.c.bf16 %v174, %v173
    %v221 = vpack.c.bf16 %v176, %v175
    %v222 = vpack.c.bf16 %v178, %v177
    %v223 = vpack.c.bf16 %v182, %v181
    %v224 = vpack.c.bf16 %v184, %v183
    %v225 = vpack.c.bf16 %v186, %v185
    %v226 = vpack.c.bf16 %v188, %v187
    %v227 = vpack.c.bf16 %v192, %v191
    %v228 = vpack.c.bf16 %v194, %v193
    %v229 = vpack.c.bf16 %v196, %v195
    %v230 = vpack.c.bf16 %v198, %v197
    %v231 = vpack.c.bf16 %v202, %v201
    %v232 = vpack.c.bf16 %v204, %v203
    %v233 = vpack.c.bf16 %v206, %v205
    %v234 = vpack.c.bf16 %v208, %v207
    %v235 = vpack.c.bf16 %v153, %v152
    %v236 = vpack.c.bf16 %v155, %v154
    %v237 = vpack.c.bf16 %v157, %v156
    %v238 = vpack.c.bf16 %v159, %v158
    %v239 = vpack.c.bf16 %v163, %v162
    %v240 = vpack.c.bf16 %v165, %v164
    %v241 = vpack.c.bf16 %v167, %v166
    %v242 = vpack.c.bf16 %v169, %v168
    %v243 = vpack.c.bf16 %v173, %v172
    %v244 = vpack.c.bf16 %v175, %v174
    %v245 = vpack.c.bf16 %v177, %v176
    %v246 = vpack.c.bf16 %v179, %v178
    %v247 = vpack.c.bf16 %v183, %v182
    %v248 = vpack.c.bf16 %v185, %v184
    %v249 = vpack.c.bf16 %v187, %v186
    %v250 = vpack.c.bf16 %v189, %v188
    %v251 = vpack.c.bf16 %v193, %v192
    %v252 = vpack.c.bf16 %v195, %v194
    %v253 = vpack.c.bf16 %v197, %v196
    %v254 = vpack.c.bf16 %v199, %v198
    %v255 = vpack.c.bf16 %v203, %v202
    %v256 = vpack.c.bf16 %v205, %v204
    %v257 = vpack.c.bf16 %v207, %v206
    %v258 = vpack.c.bf16 %v209, %v208
    %v259 = vpack.c.bf16 %v160, %v159
    %v260 = vpack.c.bf16 %v170, %v169
    %v261 = vpack.c.bf16 %v180, %v179
    %v262 = vpack.c.bf16 %v190, %v189
    %v263 = vpack.c.bf16 %v200, %v199
    %v264 = vpack.c.bf16 %v210, %v209
    %v265 = vld [vmem:[#allocation6] sm:$0xf]
    %v266 = vld [vmem:[#allocation6 + $0x4] sm:$0xf]
    %v267 = vld [vmem:[#allocation6 + $0x8] sm:$0xf]
    %v268 = vld [vmem:[#allocation6 + $0xc] sm:$0xf]
    %v269 = vld [vmem:[#allocation6 + $0x10] sm:$0xf]
    %v270 = vld [vmem:[#allocation6 + $0x14] sm:$0xf]
    %v271 = vld [vmem:[#allocation6 + $0x18] sm:$0xf]
    %v272 = vld [vmem:[#allocation6 + $0x1c] sm:$0xf]
    %v273 = vld [vmem:[#allocation6 + $0x20] sm:$0xf]
    %v274 = vld [vmem:[#allocation6 + $0x24] sm:$0xf]
    %v275 = vld [vmem:[#allocation6 + $0x28] sm:$0xf]
    %v276 = vld [vmem:[#allocation6 + $0x2c] sm:$0xf]
    %v277 = vld [vmem:[#allocation6 + $0x30] sm:$0xf]
    %v278 = vld [vmem:[#allocation6 + $0x34] sm:$0xf]
    %v279 = vld [vmem:[#allocation6 + $0x38] sm:$0xf]
    %v280 = vld [vmem:[#allocation6 + $0x3c] sm:$0xf]
    %v281 = vld [vmem:[#allocation6 + $0x40] sm:$0xf]
    %v282 = vld [vmem:[#allocation6 + $0x44] sm:$0xf]
    %v283 = vld [vmem:[#allocation6 + $0x48] sm:$0xf]
    %v284 = vld [vmem:[#allocation6 + $0x4c] sm:$0xf]
    %v285 = vld [vmem:[#allocation6 + $0x50] sm:$0xf]
    %v286 = vld [vmem:[#allocation6 + $0x54] sm:$0xf]
    %v287 = vld [vmem:[#allocation6 + $0x58] sm:$0xf]
    %v288 = vld [vmem:[#allocation6 + $0x5c] sm:$0xf]
    %v289 = vld [vmem:[#allocation6 + $0x60] sm:$0xf]
    %v290 = vld [vmem:[#allocation6 + $0x64] sm:$0xf]
    %v291 = vld [vmem:[#allocation6 + $0x68] sm:$0xf]
    %v292 = vld [vmem:[#allocation6 + $0x6c] sm:$0xf]
    %v293 = vld [vmem:[#allocation6 + $0x70] sm:$0xf]
    %v294 = vld [vmem:[#allocation6 + $0x74] sm:$0xf]
    %v295 = vld [vmem:[#allocation6 + $0x78] sm:$0xf]
    %v296 = vld [vmem:[#allocation6 + $0x7c] sm:$0xf]
    %v297 = vld [vmem:[#allocation6 + $0x80] sm:$0xf]
    %v298 = vld [vmem:[#allocation6 + $0x84] sm:$0xf]
    %v299 = vld [vmem:[#allocation6 + $0x88] sm:$0xf]
    %v300 = vld [vmem:[#allocation6 + $0x8c] sm:$0xf]
    %v301 = vld [vmem:[#allocation6 + $0x90] sm:$0xf]
    %v302 = vld [vmem:[#allocation6 + $0x94] sm:$0xf]
    %v303 = vld [vmem:[#allocation6 + $0x98] sm:$0xf]
    %v304 = vld [vmem:[#allocation6 + $0x9c] sm:$0xf]
    %v305 = vld [vmem:[#allocation6 + $0xa0] sm:$0xf]
    %v306 = vld [vmem:[#allocation6 + $0xa4] sm:$0xf]
    %v307 = vld [vmem:[#allocation6 + $0xa8] sm:$0xf]
    %v308 = vld [vmem:[#allocation6 + $0xac] sm:$0xf]
    %v309 = vld [vmem:[#allocation6 + $0xb0] sm:$0xf]
    %v310 = vld [vmem:[#allocation6 + $0xb4] sm:$0xf]
    %v311 = vld [vmem:[#allocation6 + $0xb8] sm:$0xf]
    %v312 = vld [vmem:[#allocation6 + $0xbc] sm:$0xf]
    %v313 = vld [vmem:[#allocation6 + $0xc0] sm:$0xf]
    %v314 = vld [vmem:[#allocation6 + $0xc4] sm:$0xf]
    %v315 = vld [vmem:[#allocation6 + $0xc8] sm:$0xf]
    %v316 = vld [vmem:[#allocation6 + $0xcc] sm:$0xf]
    %v317 = vld [vmem:[#allocation6 + $0xd0] sm:$0xf]
    %v318 = vld [vmem:[#allocation6 + $0xd4] sm:$0xf]
    %v319 = vld [vmem:[#allocation6 + $0xd8] sm:$0xf]
    %v320 = vld [vmem:[#allocation6 + $0xdc] sm:$0xf]
    %v321 = vld [vmem:[#allocation6 + $0xe0] sm:$0xf]
    %v322 = vld [vmem:[#allocation6 + $0xe4] sm:$0xf]
    %v323 = vld [vmem:[#allocation6 + $0xe8] sm:$0xf]
    %v324 = vld [vmem:[#allocation6 + $0xec] sm:$0xf]
    %v325 = vld [vmem:[#allocation6 + $0xf0] sm:$0xf]
    %v326 = vld [vmem:[#allocation6 + $0xf4] sm:$0xf]
    %v327 = vld [vmem:[#allocation6 + $0xf8] sm:$0xf]
    %v328 = vld [vmem:[#allocation6 + $0xfc] sm:$0xf]
    %v329 = vld [vmem:[#allocation6 + $0x100] sm:$0xf]
    %v330 = vld [vmem:[#allocation6 + $0x104] sm:$0xf]
    %v331 = vld [vmem:[#allocation6 + $0x108] sm:$0xf]
    %v332 = vld [vmem:[#allocation6 + $0x10c] sm:$0xf]
    %v333 = vld [vmem:[#allocation6 + $0x110] sm:$0xf]
    %v334 = vld [vmem:[#allocation6 + $0x114] sm:$0xf]
    %v335 = vld [vmem:[#allocation6 + $0x118] sm:$0xf]
    %v336 = vld [vmem:[#allocation6 + $0x11c] sm:$0xf]
    %v337 = vld [vmem:[#allocation6 + $0x120] sm:$0xf]
    %v338 = vld [vmem:[#allocation6 + $0x124] sm:$0xf]
    %v339 = vld [vmem:[#allocation6 + $0x128] sm:$0xf]
    %v340 = vld [vmem:[#allocation6 + $0x12c] sm:$0xf]
    %v341 = vld [vmem:[#allocation6 + $0x130] sm:$0xf]
    %v342 = vld [vmem:[#allocation6 + $0x134] sm:$0xf]
    %v343 = vld [vmem:[#allocation6 + $0x138] sm:$0xf]
    %v344 = vld [vmem:[#allocation6 + $0x13c] sm:$0xf]
    %v345 = vld [vmem:[#allocation6 + $0x140] sm:$0xf]
    %v346 = vld [vmem:[#allocation6 + $0x144] sm:$0xf]
    %v347 = vld [vmem:[#allocation6 + $0x148] sm:$0xf]
    %v348 = vld [vmem:[#allocation6 + $0x14c] sm:$0xf]
    %v349 = vld [vmem:[#allocation6 + $0x150] sm:$0xf]
    %v350 = vld [vmem:[#allocation6 + $0x154] sm:$0xf]
    %v351 = vld [vmem:[#allocation6 + $0x158] sm:$0xf]
    %v352 = vld [vmem:[#allocation6 + $0x15c] sm:$0xf]
    %v353 = vld [vmem:[#allocation6 + $0x160] sm:$0xf]
    %v354 = vld [vmem:[#allocation6 + $0x164] sm:$0xf]
    %v355 = vld [vmem:[#allocation6 + $0x168] sm:$0xf]
    %v356 = vld [vmem:[#allocation6 + $0x16c] sm:$0xf]
    %v357 = vld [vmem:[#allocation6 + $0x170] sm:$0xf]
    %v358 = vld [vmem:[#allocation6 + $0x174] sm:$0xf]
    %v359 = vld [vmem:[#allocation6 + $0x178] sm:$0xf]
    %v360 = vld [vmem:[#allocation6 + $0x17c] sm:$0xf]
    %v361 = vld [vmem:[#allocation6 + $0x180] sm:$0xf]
    %v362 = vld [vmem:[#allocation6 + $0x184] sm:$0xf]
    %v363 = vld [vmem:[#allocation6 + $0x188] sm:$0xf]
    %v364 = vld [vmem:[#allocation6 + $0x18c] sm:$0xf]
    %v365 = vld [vmem:[#allocation6 + $0x190] sm:$0xf]
    %v366 = vld [vmem:[#allocation6 + $0x194] sm:$0xf]
    %v367 = vld [vmem:[#allocation6 + $0x198] sm:$0xf]
    %v368 = vld [vmem:[#allocation6 + $0x19c] sm:$0xf]
    %v369 = vld [vmem:[#allocation6 + $0x1a0] sm:$0xf]
    %v370 = vld [vmem:[#allocation6 + $0x1a4] sm:$0xf]
    %v371 = vld [vmem:[#allocation6 + $0x1a8] sm:$0xf]
    %v372 = vld [vmem:[#allocation6 + $0x1ac] sm:$0xf]
    %v373 = vld [vmem:[#allocation6 + $0x1b0] sm:$0xf]
    %v374 = vld [vmem:[#allocation6 + $0x1b4] sm:$0xf]
    %v375 = vld [vmem:[#allocation6 + $0x1b8] sm:$0xf]
    %v376 = vld [vmem:[#allocation6 + $0x1bc] sm:$0xf]
    %v377 = vld [vmem:[#allocation6 + $0x1c0] sm:$0xf]
    %v378 = vld [vmem:[#allocation6 + $0x1c4] sm:$0xf]
    %v379 = vld [vmem:[#allocation6 + $0x1c8] sm:$0xf]
    %v380 = vld [vmem:[#allocation6 + $0x1cc] sm:$0xf]
    %v381 = vld [vmem:[#allocation6 + $0x1d0] sm:$0xf]
    %v382 = vld [vmem:[#allocation6 + $0x1d4] sm:$0xf]
    %v383 = vld [vmem:[#allocation6 + $0x1d8] sm:$0xf]
    %v384 = vld [vmem:[#allocation6 + $0x1dc] sm:$0xf]
    %v385 = vld [vmem:[#allocation6 + $0x1e0] sm:$0xf]
    %v386 = vld [vmem:[#allocation6 + $0x1e4] sm:$0xf]
    %v387 = vld [vmem:[#allocation6 + $0x1e8] sm:$0xf]
    %v388 = vld [vmem:[#allocation6 + $0x1ec] sm:$0xf]
    %v389 = vld [vmem:[#allocation6 + $0x1f0] sm:$0xf]
    %v390 = vld [vmem:[#allocation6 + $0x1f4] sm:$0xf]
    %v391 = vld [vmem:[#allocation6 + $0x1f8] sm:$0xf]
    %v392 = vld [vmem:[#allocation6 + $0x1fc] sm:$0xf]
    %v393 = vld [vmem:[#allocation6 + $0x200] sm:$0xf]
    %v394 = vld [vmem:[#allocation6 + $0x204] sm:$0xf]
    %v395 = vld [vmem:[#allocation6 + $0x208] sm:$0xf]
    %v396 = vld [vmem:[#allocation6 + $0x20c] sm:$0xf]
    %v397 = vld [vmem:[#allocation6 + $0x210] sm:$0xf]
    %v398 = vld [vmem:[#allocation6 + $0x214] sm:$0xf]
    %v399 = vld [vmem:[#allocation6 + $0x218] sm:$0xf]
    %v400 = vld [vmem:[#allocation6 + $0x21c] sm:$0xf]
    %v401 = vld [vmem:[#allocation6 + $0x220] sm:$0xf]
    %v402 = vld [vmem:[#allocation6 + $0x224] sm:$0xf]
    %v403 = vld [vmem:[#allocation6 + $0x228] sm:$0xf]
    %v404 = vld [vmem:[#allocation6 + $0x22c] sm:$0xf]
    %v405 = vld [vmem:[#allocation6 + $0x230] sm:$0xf]
    %v406 = vld [vmem:[#allocation6 + $0x234] sm:$0xf]
    %v407 = vld [vmem:[#allocation6 + $0x238] sm:$0xf]
    %v408 = vld [vmem:[#allocation6 + $0x23c] sm:$0xf]
    %v553 = vunpack.c.l.b16 %v265
    %v554 = vunpack.c.l.b16 %v266
    %v555 = vunpack.c.l.b16 %v267
    %v556 = vunpack.c.l.b16 %v268
    %v557 = vunpack.c.l.b16 %v269
    %v558 = vunpack.c.l.b16 %v270
    %v559 = vunpack.c.l.b16 %v271
    %v560 = vunpack.c.l.b16 %v272
    %v561 = vunpack.c.l.b16 %v273
    %v562 = vunpack.c.l.b16 %v274
    %v563 = vunpack.c.l.b16 %v275
    %v564 = vunpack.c.l.b16 %v276
    %v565 = vunpack.c.l.b16 %v277
    %v566 = vunpack.c.l.b16 %v278
    %v567 = vunpack.c.l.b16 %v279
    %v568 = vunpack.c.l.b16 %v280
    %v569 = vunpack.c.l.b16 %v281
    %v570 = vunpack.c.l.b16 %v282
    %v571 = vunpack.c.l.b16 %v283
    %v572 = vunpack.c.l.b16 %v284
    %v573 = vunpack.c.l.b16 %v285
    %v574 = vunpack.c.l.b16 %v286
    %v575 = vunpack.c.l.b16 %v287
    %v576 = vunpack.c.l.b16 %v288
    %v577 = vunpack.c.l.b16 %v289
    %v578 = vunpack.c.l.b16 %v290
    %v579 = vunpack.c.l.b16 %v291
    %v580 = vunpack.c.l.b16 %v292
    %v581 = vunpack.c.l.b16 %v293
    %v582 = vunpack.c.l.b16 %v294
    %v583 = vunpack.c.l.b16 %v295
    %v584 = vunpack.c.l.b16 %v296
    %v585 = vunpack.c.l.b16 %v297
    %v586 = vunpack.c.l.b16 %v298
    %v587 = vunpack.c.l.b16 %v299
    %v588 = vunpack.c.l.b16 %v300
    %v589 = vunpack.c.l.b16 %v301
    %v590 = vunpack.c.l.b16 %v302
    %v591 = vunpack.c.l.b16 %v303
    %v592 = vunpack.c.l.b16 %v304
    %v593 = vunpack.c.l.b16 %v305
    %v594 = vunpack.c.l.b16 %v306
    %v595 = vunpack.c.l.b16 %v307
    %v596 = vunpack.c.l.b16 %v308
    %v597 = vunpack.c.l.b16 %v309
    %v598 = vunpack.c.l.b16 %v310
    %v599 = vunpack.c.l.b16 %v311
    %v600 = vunpack.c.l.b16 %v312
    %v601 = vunpack.c.l.b16 %v313
    %v602 = vunpack.c.l.b16 %v314
    %v603 = vunpack.c.l.b16 %v315
    %v604 = vunpack.c.l.b16 %v316
    %v605 = vunpack.c.l.b16 %v317
    %v606 = vunpack.c.l.b16 %v318
    %v607 = vunpack.c.l.b16 %v319
    %v608 = vunpack.c.l.b16 %v320
    %v609 = vunpack.c.l.b16 %v321
    %v610 = vunpack.c.l.b16 %v322
    %v611 = vunpack.c.l.b16 %v323
    %v612 = vunpack.c.l.b16 %v324
    %v613 = vunpack.c.l.b16 %v325
    %v614 = vunpack.c.l.b16 %v326
    %v615 = vunpack.c.l.b16 %v327
    %v616 = vunpack.c.l.b16 %v328
    %v617 = vunpack.c.l.b16 %v329
    %v618 = vunpack.c.l.b16 %v330
    %v619 = vunpack.c.l.b16 %v331
    %v620 = vunpack.c.l.b16 %v332
    %v621 = vunpack.c.l.b16 %v333
    %v622 = vunpack.c.l.b16 %v334
    %v623 = vunpack.c.l.b16 %v335
    %v624 = vunpack.c.l.b16 %v336
    %v625 = vunpack.c.l.b16 %v337
    %v626 = vunpack.c.l.b16 %v338
    %v627 = vunpack.c.l.b16 %v339
    %v628 = vunpack.c.l.b16 %v340
    %v629 = vunpack.c.l.b16 %v341
    %v630 = vunpack.c.l.b16 %v342
    %v631 = vunpack.c.l.b16 %v343
    %v632 = vunpack.c.l.b16 %v344
    %v633 = vunpack.c.l.b16 %v345
    %v634 = vunpack.c.l.b16 %v346
    %v635 = vunpack.c.l.b16 %v347
    %v636 = vunpack.c.l.b16 %v348
    %v637 = vunpack.c.l.b16 %v349
    %v638 = vunpack.c.l.b16 %v350
    %v639 = vunpack.c.l.b16 %v351
    %v640 = vunpack.c.l.b16 %v352
    %v641 = vunpack.c.l.b16 %v353
    %v642 = vunpack.c.l.b16 %v354
    %v643 = vunpack.c.l.b16 %v355
    %v644 = vunpack.c.l.b16 %v356
    %v645 = vunpack.c.l.b16 %v357
    %v646 = vunpack.c.l.b16 %v358
    %v647 = vunpack.c.l.b16 %v359
    %v648 = vunpack.c.l.b16 %v360
    %v649 = vunpack.c.l.b16 %v361
    %v650 = vunpack.c.l.b16 %v362
    %v651 = vunpack.c.l.b16 %v363
    %v652 = vunpack.c.l.b16 %v364
    %v653 = vunpack.c.l.b16 %v365
    %v654 = vunpack.c.l.b16 %v366
    %v655 = vunpack.c.l.b16 %v367
    %v656 = vunpack.c.l.b16 %v368
    %v657 = vunpack.c.l.b16 %v369
    %v658 = vunpack.c.l.b16 %v370
    %v659 = vunpack.c.l.b16 %v371
    %v660 = vunpack.c.l.b16 %v372
    %v661 = vunpack.c.l.b16 %v373
    %v662 = vunpack.c.l.b16 %v374
    %v663 = vunpack.c.l.b16 %v375
    %v664 = vunpack.c.l.b16 %v376
    %v665 = vunpack.c.l.b16 %v377
    %v666 = vunpack.c.l.b16 %v378
    %v667 = vunpack.c.l.b16 %v379
    %v668 = vunpack.c.l.b16 %v380
    %v669 = vunpack.c.l.b16 %v381
    %v670 = vunpack.c.l.b16 %v382
    %v671 = vunpack.c.l.b16 %v383
    %v672 = vunpack.c.l.b16 %v384
    %v673 = vunpack.c.l.b16 %v385
    %v674 = vunpack.c.l.b16 %v386
    %v675 = vunpack.c.l.b16 %v387
    %v676 = vunpack.c.l.b16 %v388
    %v677 = vunpack.c.l.b16 %v389
    %v678 = vunpack.c.l.b16 %v390
    %v679 = vunpack.c.l.b16 %v391
    %v680 = vunpack.c.l.b16 %v392
    %v681 = vunpack.c.l.b16 %v393
    %v682 = vunpack.c.l.b16 %v394
    %v683 = vunpack.c.l.b16 %v395
    %v684 = vunpack.c.l.b16 %v396
    %v685 = vunpack.c.l.b16 %v397
    %v686 = vunpack.c.l.b16 %v398
    %v687 = vunpack.c.l.b16 %v399
    %v688 = vunpack.c.l.b16 %v400
    %v689 = vunpack.c.l.b16 %v401
    %v690 = vunpack.c.l.b16 %v402
    %v691 = vunpack.c.l.b16 %v403
    %v692 = vunpack.c.l.b16 %v404
    %v693 = vunpack.c.l.b16 %v405
    %v694 = vunpack.c.l.b16 %v406
    %v695 = vunpack.c.l.b16 %v407
    %v696 = vunpack.c.l.b16 %v408
    %v697 = vpack.c.b16 %v554, %v553
    %v698 = vpack.c.b16 %v556, %v555
    %v699 = vpack.c.b16 %v558, %v557
    %v700 = vpack.c.b16 %v560, %v559
    %v701 = vpack.c.b16 %v562, %v561
    %v702 = vpack.c.b16 %v564, %v563
    %v703 = vpack.c.b16 %v566, %v565
    %v704 = vpack.c.b16 %v568, %v567
    %v705 = vpack.c.b16 %v570, %v569
    %v706 = vpack.c.b16 %v572, %v571
    %v707 = vpack.c.b16 %v574, %v573
    %v708 = vpack.c.b16 %v576, %v575
    %v709 = vpack.c.b16 %v578, %v577
    %v710 = vpack.c.b16 %v580, %v579
    %v711 = vpack.c.b16 %v582, %v581
    %v712 = vpack.c.b16 %v584, %v583
    %v713 = vpack.c.b16 %v586, %v585
    %v714 = vpack.c.b16 %v588, %v587
    %v715 = vpack.c.b16 %v590, %v589
    %v716 = vpack.c.b16 %v592, %v591
    %v717 = vpack.c.b16 %v594, %v593
    %v718 = vpack.c.b16 %v596, %v595
    %v719 = vpack.c.b16 %v598, %v597
    %v720 = vpack.c.b16 %v600, %v599
    %v721 = vpack.c.b16 %v602, %v601
    %v722 = vpack.c.b16 %v604, %v603
    %v723 = vpack.c.b16 %v606, %v605
    %v724 = vpack.c.b16 %v608, %v607
    %v725 = vpack.c.b16 %v610, %v609
    %v726 = vpack.c.b16 %v612, %v611
    %v727 = vpack.c.b16 %v614, %v613
    %v728 = vpack.c.b16 %v616, %v615
    %v729 = vpack.c.b16 %v618, %v617
    %v730 = vpack.c.b16 %v620, %v619
    %v731 = vpack.c.b16 %v622, %v621
    %v732 = vpack.c.b16 %v624, %v623
    %v733 = vpack.c.b16 %v626, %v625
    %v734 = vpack.c.b16 %v628, %v627
    %v735 = vpack.c.b16 %v630, %v629
    %v736 = vpack.c.b16 %v632, %v631
    %v737 = vpack.c.b16 %v634, %v633
    %v738 = vpack.c.b16 %v636, %v635
    %v739 = vpack.c.b16 %v638, %v637
    %v740 = vpack.c.b16 %v640, %v639
    %v741 = vpack.c.b16 %v642, %v641
    %v742 = vpack.c.b16 %v644, %v643
    %v743 = vpack.c.b16 %v646, %v645
    %v744 = vpack.c.b16 %v648, %v647
    %v745 = vpack.c.b16 %v650, %v649
    %v746 = vpack.c.b16 %v652, %v651
    %v747 = vpack.c.b16 %v654, %v653
    %v748 = vpack.c.b16 %v656, %v655
    %v749 = vpack.c.b16 %v658, %v657
    %v750 = vpack.c.b16 %v660, %v659
    %v751 = vpack.c.b16 %v662, %v661
    %v752 = vpack.c.b16 %v664, %v663
    %v753 = vpack.c.b16 %v666, %v665
    %v754 = vpack.c.b16 %v668, %v667
    %v755 = vpack.c.b16 %v670, %v669
    %v756 = vpack.c.b16 %v672, %v671
    %v757 = vpack.c.b16 %v674, %v673
    %v758 = vpack.c.b16 %v676, %v675
    %v759 = vpack.c.b16 %v678, %v677
    %v760 = vpack.c.b16 %v680, %v679
    %v761 = vpack.c.b16 %v682, %v681
    %v762 = vpack.c.b16 %v684, %v683
    %v763 = vpack.c.b16 %v686, %v685
    %v764 = vpack.c.b16 %v688, %v687
    %v765 = vpack.c.b16 %v690, %v689
    %v766 = vpack.c.b16 %v692, %v691
    %v767 = vpack.c.b16 %v694, %v693
    %v768 = vpack.c.b16 %v696, %v695
    %841 = vmatprep.subr.bf16.mxu0 0
    %842 = vmatpush1.bf16.msra.mxu0 %v697
    %843 = vmatprep.subr.bf16.mxu0 0
    %844 = vmatpush1.bf16.msra.mxu0 %v698
    %845 = vmatprep.subr.bf16.mxu0 0
    %846 = vmatpush1.bf16.msra.mxu0 %v699
    %847 = vmatprep.subr.bf16.mxu0 0
    %848 = vmatpush1.bf16.msra.mxu0 %v700
    %849 = vmatprep.subr.bf16.mxu0 0
    %850 = vmatpush1.bf16.msra.mxu0 %v701
    %851 = vmatprep.subr.bf16.mxu0 0
    %852 = vmatpush1.bf16.msra.mxu0 %v702
    %853 = vmatprep.subr.bf16.mxu0 0
    %854 = vmatpush1.bf16.msra.mxu0 %v703
    %855 = vmatprep.subr.bf16.mxu0 0
    %856 = vmatpush1.bf16.msra.mxu0 %v704
    %857 = vmatprep.subr.bf16.mxu0 0
    %858 = vmatpush1.bf16.msra.mxu0 %v705
    %859 = vmatprep.subr.bf16.mxu0 0
    %860 = vmatpush1.bf16.msra.mxu0 %v706
    %861 = vmatprep.subr.bf16.mxu0 0
    %862 = vmatpush1.bf16.msra.mxu0 %v707
    %863 = vmatprep.subr.bf16.mxu0 0
    %864 = vmatpush1.bf16.msra.mxu0 %v708
    %865 = vmatprep.subr.bf16.mxu0 0
    %866 = vmatpush1.bf16.msra.mxu0 %v709
    %867 = vmatprep.subr.bf16.mxu0 0
    %868 = vmatpush1.bf16.msra.mxu0 %v710
    %869 = vmatprep.subr.bf16.mxu0 0
    %870 = vmatpush1.bf16.msra.mxu0 %v711
    %871 = vmatprep.subr.bf16.mxu0 0
    %872 = vmatpush1.bf16.msra.mxu0 %v712
    %873 = vmatprep.mubr.bf16.mxu0 %v219
    %874 = vmatmul.mubr.bf16.gmra.mrb[0].mxu0 %v211
    %v875 = vpop.f32.mrb[0].mxu0
    %v876 = vadd.f32 0.0, %v875
    %v877 = vpop.f32.mrb[0].mxu0
    %v878 = vpop.f32.mrb[0].mxu0
    %v879 = vadd.f32 0.0, %v878
    %v880 = vpop.f32.mrb[0].mxu0
    %881 = vmatprep.mubr.bf16.mxu0 %v220
    %882 = vmatmul.mubr.bf16.gmra.mrb[0].mxu0 %v212
    %v883 = vpop.f32.mrb[0].mxu0
    %v884 = vadd.f32 0.0, %v883
    %v885 = vpop.f32.mrb[0].mxu0
    %v886 = vpop.f32.mrb[0].mxu0
    %v887 = vadd.f32 0.0, %v886
    %v888 = vpop.f32.mrb[0].mxu0
    %889 = vmatprep.mubr.bf16.mxu0 %v221
    %890 = vmatmul.mubr.bf16.gmra.mrb[0].mxu0 %v213
    %v891 = vpop.f32.mrb[0].mxu0
    %v892 = vadd.f32 0.0, %v891
    %v893 = vpop.f32.mrb[0].mxu0
    %v894 = vpop.f32.mrb[0].mxu0
    %v895 = vadd.f32 0.0, %v894
    %v896 = vpop.f32.mrb[0].mxu0
    %897 = vmatprep.mubr.bf16.mxu0 %v222
    %898 = vmatmul.mubr.bf16.gmra.mrb[0].mxu0 %v214
    %v899 = vpop.f32.mrb[0].mxu0
    %v900 = vadd.f32 0.0, %v899
    %v901 = vpop.f32.mrb[0].mxu0
    %v902 = vpop.f32.mrb[0].mxu0
    %v903 = vadd.f32 0.0, %v902
    %v904 = vpop.f32.mrb[0].mxu0
    %905 = vmatprep.mubr.bf16.mxu0 %v223
    %906 = vmatmul.mubr.bf16.gmra.mrb[0].mxu0 %v215
    %v907 = vpop.f32.mrb[0].mxu0
    %v908 = vadd.f32 0.0, %v907
    %v909 = vpop.f32.mrb[0].mxu0
    %v910 = vpop.f32.mrb[0].mxu0
    %v911 = vadd.f32 0.0, %v910
    %v912 = vpop.f32.mrb[0].mxu0
    %913 = vmatprep.mubr.bf16.mxu0 %v224
    %914 = vmatmul.mubr.bf16.gmra.mrb[0].mxu0 %v216
    %v915 = vpop.f32.mrb[0].mxu0
    %v916 = vadd.f32 0.0, %v915
    %v917 = vpop.f32.mrb[0].mxu0
    %v918 = vpop.f32.mrb[0].mxu0
    %v919 = vadd.f32 0.0, %v918
    %v920 = vpop.f32.mrb[0].mxu0
    %921 = vmatprep.mubr.bf16.mxu0 %v225
    %922 = vmatmul.mubr.bf16.gmra.mrb[0].mxu0 %v217
    %v923 = vpop.f32.mrb[0].mxu0
    %v924 = vadd.f32 0.0, %v923
    %v925 = vpop.f32.mrb[0].mxu0
    %v926 = vpop.f32.mrb[0].mxu0
    %v927 = vadd.f32 0.0, %v926
    %v928 = vpop.f32.mrb[0].mxu0
    %929 = vmatprep.mubr.bf16.mxu0 %v226
    %930 = vmatmul.mubr.bf16.gmra.mrb[0].mxu0 %v218
    %v931 = vpop.f32.mrb[0].mxu0
    %v932 = vadd.f32 0.0, %v931
    %v933 = vpop.f32.mrb[0].mxu0
    %v934 = vpop.f32.mrb[0].mxu0
    %v935 = vadd.f32 0.0, %v934
    %v936 = vpop.f32.mrb[0].mxu0
    %937 = vdwg.mxu0
    %938 = vmatprep.subr.bf16.mxu0 0
    %939 = vmatpush1.bf16.msra.mxu0 %v713
    %940 = vmatprep.subr.bf16.mxu0 0
    %941 = vmatpush1.bf16.msra.mxu0 %v714
    %942 = vmatprep.subr.bf16.mxu0 0
    %943 = vmatpush1.bf16.msra.mxu0 %v715
    %944 = vmatprep.subr.bf16.mxu0 0
    %945 = vmatpush1.bf16.msra.mxu0 %v716
    %946 = vmatprep.subr.bf16.mxu0 0
    %947 = vmatpush1.bf16.msra.mxu0 %v717
    %948 = vmatprep.subr.bf16.mxu0 0
    %949 = vmatpush1.bf16.msra.mxu0 %v718
    %950 = vmatprep.subr.bf16.mxu0 0
    %951 = vmatpush1.bf16.msra.mxu0 %v719
    %952 = vmatprep.subr.bf16.mxu0 0
    %953 = vmatpush1.bf16.msra.mxu0 %v720
    %954 = vmatprep.subr.bf16.mxu0 0
    %955 = vmatpush1.bf16.msra.mxu0 %v721
    %956 = vmatprep.subr.bf16.mxu0 0
    %957 = vmatpush1.bf16.msra.mxu0 %v722
    %958 = vmatprep.subr.bf16.mxu0 0
    %959 = vmatpush1.bf16.msra.mxu0 %v723
    %960 = vmatprep.subr.bf16.mxu0 0
    %961 = vmatpush1.bf16.msra.mxu0 %v724
    %962 = vmatprep.subr.bf16.mxu0 0
    %963 = vmatpush1.bf16.msra.mxu0 %v725
    %964 = vmatprep.subr.bf16.mxu0 0
    %965 = vmatpush1.bf16.msra.mxu0 %v726
    %966 = vmatprep.subr.bf16.mxu0 0
    %967 = vmatpush1.bf16.msra.mxu0 %v727
    %968 = vmatprep.subr.bf16.mxu0 0
    %969 = vmatpush1.bf16.msra.mxu0 %v728
    %970 = vmatprep.mubr.bf16.mxu0 %v235
    %971 = vmatmul.mubr.bf16.gmra.mrb[0].mxu0 %v227
    %v972 = vpop.f32.mrb[0].mxu0
    %v973 = vadd.f32 %v876, %v972
    %v974 = vpop.f32.mrb[0].mxu0
    %v975 = vpop.f32.mrb[0].mxu0
    %v976 = vadd.f32 %v879, %v975
    %v977 = vpop.f32.mrb[0].mxu0
    %978 = vmatprep.mubr.bf16.mxu0 %v236
    %979 = vmatmul.mubr.bf16.gmra.mrb[0].mxu0 %v228
    %v980 = vpop.f32.mrb[0].mxu0
    %v981 = vadd.f32 %v884, %v980
    %v982 = vpop.f32.mrb[0].mxu0
    %v983 = vpop.f32.mrb[0].mxu0
    %v984 = vadd.f32 %v887, %v983
    %v985 = vpop.f32.mrb[0].mxu0
    %986 = vmatprep.mubr.bf16.mxu0 %v237
    %987 = vmatmul.mubr.bf16.gmra.mrb[0].mxu0 %v229
    %v988 = vpop.f32.mrb[0].mxu0
    %v989 = vadd.f32 %v892, %v988
    %v990 = vpop.f32.mrb[0].mxu0
    %v991 = vpop.f32.mrb[0].mxu0
    %v992 = vadd.f32 %v895, %v991
    %v993 = vpop.f32.mrb[0].mxu0
    %994 = vmatprep.mubr.bf16.mxu0 %v238
    %995 = vmatmul.mubr.bf16.gmra.mrb[0].mxu0 %v230
    %v996 = vpop.f32.mrb[0].mxu0
    %v997 = vadd.f32 %v900, %v996
    %v998 = vpop.f32.mrb[0].mxu0
    %v999 = vpop.f32.mrb[0].mxu0
    %v1000 = vadd.f32 %v903, %v999
    %v1001 = vpop.f32.mrb[0].mxu0
    %1002 = vmatprep.mubr.bf16.mxu0 %v239
    %1003 = vmatmul.mubr.bf16.gmra.mrb[0].mxu0 %v231
    %v1004 = vpop.f32.mrb[0].mxu0
    %v1005 = vadd.f32 %v908, %v1004
    %v1006 = vpop.f32.mrb[0].mxu0
    %v1007 = vpop.f32.mrb[0].mxu0
    %v1008 = vadd.f32 %v911, %v1007
    %v1009 = vpop.f32.mrb[0].mxu0
    %1010 = vmatprep.mubr.bf16.mxu0 %v240
    %1011 = vmatmul.mubr.bf16.gmra.mrb[0].mxu0 %v232
    %v1012 = vpop.f32.mrb[0].mxu0
    %v1013 = vadd.f32 %v916, %v1012
    %v1014 = vpop.f32.mrb[0].mxu0
    %v1015 = vpop.f32.mrb[0].mxu0
    %v1016 = vadd.f32 %v919, %v1015
    %v1017 = vpop.f32.mrb[0].mxu0
    %1018 = vmatprep.mubr.bf16.mxu0 %v241
    %1019 = vmatmul.mubr.bf16.gmra.mrb[0].mxu0 %v233
    %v1020 = vpop.f32.mrb[0].mxu0
    %v1021 = vadd.f32 %v924, %v1020
    %v1022 = vpop.f32.mrb[0].mxu0
    %v1023 = vpop.f32.mrb[0].mxu0
    %v1024 = vadd.f32 %v927, %v1023
    %v1025 = vpop.f32.mrb[0].mxu0
    %1026 = vmatprep.mubr.bf16.mxu0 %v242
    %1027 = vmatmul.mubr.bf16.gmra.mrb[0].mxu0 %v234
    %v1028 = vpop.f32.mrb[0].mxu0
    %v1029 = vadd.f32 %v932, %v1028
    %v1030 = vpop.f32.mrb[0].mxu0
    %v1031 = vpop.f32.mrb[0].mxu0
    %v1032 = vadd.f32 %v935, %v1031
    %v1033 = vpop.f32.mrb[0].mxu0
    %1034 = vdwg.mxu0
    %1035 = vmatprep.subr.bf16.mxu0 0
    %1036 = vmatpush1.bf16.msra.mxu0 %v729
    %1037 = vmatprep.subr.bf16.mxu0 0
    %1038 = vmatpush1.bf16.msra.mxu0 %v730
    %1039 = vmatprep.subr.bf16.mxu0 0
    %1040 = vmatpush1.bf16.msra.mxu0 %v731
    %1041 = vmatprep.subr.bf16.mxu0 0
    %1042 = vmatpush1.bf16.msra.mxu0 %v732
    %1043 = vmatprep.subr.bf16.mxu0 0
    %1044 = vmatpush1.bf16.msra.mxu0 %v733
    %1045 = vmatprep.subr.bf16.mxu0 0
    %1046 = vmatpush1.bf16.msra.mxu0 %v734
    %1047 = vmatprep.subr.bf16.mxu0 0
    %1048 = vmatpush1.bf16.msra.mxu0 %v735
    %1049 = vmatprep.subr.bf16.mxu0 0
    %1050 = vmatpush1.bf16.msra.mxu0 %v736
    %1051 = vmatprep.subr.bf16.mxu0 0
    %1052 = vmatpush1.bf16.msra.mxu0 %v737
    %1053 = vmatprep.subr.bf16.mxu0 0
    %1054 = vmatpush1.bf16.msra.mxu0 %v738
    %1055 = vmatprep.subr.bf16.mxu0 0
    %1056 = vmatpush1.bf16.msra.mxu0 %v739
    %1057 = vmatprep.subr.bf16.mxu0 0
    %1058 = vmatpush1.bf16.msra.mxu0 %v740
    %1059 = vmatprep.subr.bf16.mxu0 0
    %1060 = vmatpush1.bf16.msra.mxu0 %v741
    %1061 = vmatprep.subr.bf16.mxu0 0
    %1062 = vmatpush1.bf16.msra.mxu0 %v742
    %1063 = vmatprep.subr.bf16.mxu0 0
    %1064 = vmatpush1.bf16.msra.mxu0 %v743
    %1065 = vmatprep.subr.bf16.mxu0 0
    %1066 = vmatpush1.bf16.msra.mxu0 %v744
    %1067 = vmatprep.mubr.bf16.mxu0 %v251
    %1068 = vmatmul.mubr.bf16.gmra.mrb[0].mxu0 %v243
    %v1069 = vpop.f32.mrb[0].mxu0
    %v1070 = vadd.f32 %v973, %v1069
    %v1071 = vpop.f32.mrb[0].mxu0
    %v1072 = vpop.f32.mrb[0].mxu0
    %v1073 = vadd.f32 %v976, %v1072
    %v1074 = vpop.f32.mrb[0].mxu0
    %1075 = vmatprep.mubr.bf16.mxu0 %v252
    %1076 = vmatmul.mubr.bf16.gmra.mrb[0].mxu0 %v244
    %v1077 = vpop.f32.mrb[0].mxu0
    %v1078 = vadd.f32 %v981, %v1077
    %v1079 = vpop.f32.mrb[0].mxu0
    %v1080 = vpop.f32.mrb[0].mxu0
    %v1081 = vadd.f32 %v984, %v1080
    %v1082 = vpop.f32.mrb[0].mxu0
    %1083 = vmatprep.mubr.bf16.mxu0 %v253
    %1084 = vmatmul.mubr.bf16.gmra.mrb[0].mxu0 %v245
    %v1085 = vpop.f32.mrb[0].mxu0
    %v1086 = vadd.f32 %v989, %v1085
    %v1087 = vpop.f32.mrb[0].mxu0
    %v1088 = vpop.f32.mrb[0].mxu0
    %v1089 = vadd.f32 %v992, %v1088
    %v1090 = vpop.f32.mrb[0].mxu0
    %1091 = vmatprep.mubr.bf16.mxu0 %v254
    %1092 = vmatmul.mubr.bf16.gmra.mrb[0].mxu0 %v246
    %v1093 = vpop.f32.mrb[0].mxu0
    %v1094 = vadd.f32 %v997, %v1093
    %v1095 = vpop.f32.mrb[0].mxu0
    %v1096 = vpop.f32.mrb[0].mxu0
    %v1097 = vadd.f32 %v1000, %v1096
    %v1098 = vpop.f32.mrb[0].mxu0
    %1099 = vmatprep.mubr.bf16.mxu0 %v255
    %1100 = vmatmul.mubr.bf16.gmra.mrb[0].mxu0 %v247
    %v1101 = vpop.f32.mrb[0].mxu0
    %v1102 = vadd.f32 %v1005, %v1101
    %v1103 = vpop.f32.mrb[0].mxu0
    %v1104 = vpop.f32.mrb[0].mxu0
    %v1105 = vadd.f32 %v1008, %v1104
    %v1106 = vpop.f32.mrb[0].mxu0
    %1107 = vmatprep.mubr.bf16.mxu0 %v256
    %1108 = vmatmul.mubr.bf16.gmra.mrb[0].mxu0 %v248
    %v1109 = vpop.f32.mrb[0].mxu0
    %v1110 = vadd.f32 %v1013, %v1109
    %v1111 = vpop.f32.mrb[0].mxu0
    %v1112 = vpop.f32.mrb[0].mxu0
    %v1113 = vadd.f32 %v1016, %v1112
    %v1114 = vpop.f32.mrb[0].mxu0
    %1115 = vmatprep.mubr.bf16.mxu0 %v257
    %1116 = vmatmul.mubr.bf16.gmra.mrb[0].mxu0 %v249
    %v1117 = vpop.f32.mrb[0].mxu0
    %v1118 = vadd.f32 %v1021, %v1117
    %v1119 = vpop.f32.mrb[0].mxu0
    %v1120 = vpop.f32.mrb[0].mxu0
    %v1121 = vadd.f32 %v1024, %v1120
    %v1122 = vpop.f32.mrb[0].mxu0
    %1123 = vmatprep.mubr.bf16.mxu0 %v258
    %1124 = vmatmul.mubr.bf16.gmra.mrb[0].mxu0 %v250
    %v1125 = vpop.f32.mrb[0].mxu0
    %v1126 = vadd.f32 %v1029, %v1125
    %v1127 = vpop.f32.mrb[0].mxu0
    %v1128 = vpop.f32.mrb[0].mxu0
    %v1129 = vadd.f32 %v1032, %v1128
    %v1130 = vpop.f32.mrb[0].mxu0
    %1131 = vdwg.mxu0
    %1132 = vmatprep.subr.bf16.mxu0 0
    %1133 = vmatpush1.bf16.msra.mxu0 %v745
    %1134 = vmatprep.subr.bf16.mxu0 0
    %1135 = vmatpush1.bf16.msra.mxu0 %v746
    %1136 = vmatprep.subr.bf16.mxu0 0
    %1137 = vmatpush1.bf16.msra.mxu0 %v747
    %1138 = vmatprep.subr.bf16.mxu0 0
    %1139 = vmatpush1.bf16.msra.mxu0 %v748
    %1140 = vmatprep.subr.bf16.mxu0 0
    %1141 = vmatpush1.bf16.msra.mxu0 %v749
    %1142 = vmatprep.subr.bf16.mxu0 0
    %1143 = vmatpush1.bf16.msra.mxu0 %v750
    %1144 = vmatprep.subr.bf16.mxu0 0
    %1145 = vmatpush1.bf16.msra.mxu0 %v751
    %1146 = vmatprep.subr.bf16.mxu0 0
    %1147 = vmatpush1.bf16.msra.mxu0 %v752
    %1148 = vmatprep.subr.bf16.mxu0 0
    %1149 = vmatpush1.bf16.msra.mxu0 %v753
    %1150 = vmatprep.subr.bf16.mxu0 0
    %1151 = vmatpush1.bf16.msra.mxu0 %v754
    %1152 = vmatprep.subr.bf16.mxu0 0
    %1153 = vmatpush1.bf16.msra.mxu0 %v755
    %1154 = vmatprep.subr.bf16.mxu0 0
    %1155 = vmatpush1.bf16.msra.mxu0 %v756
    %1156 = vmatprep.subr.bf16.mxu0 0
    %1157 = vmatpush1.bf16.msra.mxu0 %v757
    %1158 = vmatprep.subr.bf16.mxu0 0
    %1159 = vmatpush1.bf16.msra.mxu0 %v758
    %1160 = vmatprep.subr.bf16.mxu0 0
    %1161 = vmatpush1.bf16.msra.mxu0 %v759
    %1162 = vmatprep.subr.bf16.mxu0 0
    %1163 = vmatpush1.bf16.msra.mxu0 %v760
    %1164 = vmatprep.mubr.bf16.mxu0 %v220
    %1165 = vmatmul.mubr.bf16.gmra.mrb[0].mxu0 %v212
    %v1166 = vpop.f32.mrb[0].mxu0
    %v1167 = vadd.f32 %v1070, %v1166
    %v1168 = vpop.f32.mrb[0].mxu0
    %v1169 = vpop.f32.mrb[0].mxu0
    %v1170 = vadd.f32 %v1073, %v1169
    %v1171 = vpop.f32.mrb[0].mxu0
    %1172 = vmatprep.mubr.bf16.mxu0 %v221
    %1173 = vmatmul.mubr.bf16.gmra.mrb[0].mxu0 %v213
    %v1174 = vpop.f32.mrb[0].mxu0
    %v1175 = vadd.f32 %v1078, %v1174
    %v1176 = vpop.f32.mrb[0].mxu0
    %v1177 = vpop.f32.mrb[0].mxu0
    %v1178 = vadd.f32 %v1081, %v1177
    %v1179 = vpop.f32.mrb[0].mxu0
    %1180 = vmatprep.mubr.bf16.mxu0 %v222
    %1181 = vmatmul.mubr.bf16.gmra.mrb[0].mxu0 %v214
    %v1182 = vpop.f32.mrb[0].mxu0
    %v1183 = vadd.f32 %v1086, %v1182
    %v1184 = vpop.f32.mrb[0].mxu0
    %v1185 = vpop.f32.mrb[0].mxu0
    %v1186 = vadd.f32 %v1089, %v1185
    %v1187 = vpop.f32.mrb[0].mxu0
    %1188 = vmatprep.mubr.bf16.mxu0 %v261
    %1189 = vmatmul.mubr.bf16.gmra.mrb[0].mxu0 %v259
    %v1190 = vpop.f32.mrb[0].mxu0
    %v1191 = vadd.f32 %v1094, %v1190
    %v1192 = vpop.f32.mrb[0].mxu0
    %v1193 = vpop.f32.mrb[0].mxu0
    %v1194 = vadd.f32 %v1097, %v1193
    %v1195 = vpop.f32.mrb[0].mxu0
    %1196 = vmatprep.mubr.bf16.mxu0 %v224
    %1197 = vmatmul.mubr.bf16.gmra.mrb[0].mxu0 %v216
    %v1198 = vpop.f32.mrb[0].mxu0
    %v1199 = vadd.f32 %v1102, %v1198
    %v1200 = vpop.f32.mrb[0].mxu0
    %v1201 = vpop.f32.mrb[0].mxu0
    %v1202 = vadd.f32 %v1105, %v1201
    %v1203 = vpop.f32.mrb[0].mxu0
    %1204 = vmatprep.mubr.bf16.mxu0 %v225
    %1205 = vmatmul.mubr.bf16.gmra.mrb[0].mxu0 %v217
    %v1206 = vpop.f32.mrb[0].mxu0
    %v1207 = vadd.f32 %v1110, %v1206
    %v1208 = vpop.f32.mrb[0].mxu0
    %v1209 = vpop.f32.mrb[0].mxu0
    %v1210 = vadd.f32 %v1113, %v1209
    %v1211 = vpop.f32.mrb[0].mxu0
    %1212 = vmatprep.mubr.bf16.mxu0 %v226
    %1213 = vmatmul.mubr.bf16.gmra.mrb[0].mxu0 %v218
    %v1214 = vpop.f32.mrb[0].mxu0
    %v1215 = vadd.f32 %v1118, %v1214
    %v1216 = vpop.f32.mrb[0].mxu0
    %v1217 = vpop.f32.mrb[0].mxu0
    %v1218 = vadd.f32 %v1121, %v1217
    %v1219 = vpop.f32.mrb[0].mxu0
    %1220 = vmatprep.mubr.bf16.mxu0 %v262
    %1221 = vmatmul.mubr.bf16.gmra.mrb[0].mxu0 %v260
    %v1222 = vpop.f32.mrb[0].mxu0
    %v1223 = vadd.f32 %v1126, %v1222
    %v1224 = vpop.f32.mrb[0].mxu0
    %v1225 = vpop.f32.mrb[0].mxu0
    %v1226 = vadd.f32 %v1129, %v1225
    %v1227 = vpop.f32.mrb[0].mxu0
    %1228 = vdwg.mxu0
    %1229 = vmatprep.subr.bf16.mxu0 0
    %1230 = vmatpush1.bf16.msra.mxu0 %v761
    %1231 = vmatprep.subr.bf16.mxu0 0
    %1232 = vmatpush1.bf16.msra.mxu0 %v762
    %1233 = vmatprep.subr.bf16.mxu0 0
    %1234 = vmatpush1.bf16.msra.mxu0 %v763
    %1235 = vmatprep.subr.bf16.mxu0 0
    %1236 = vmatpush1.bf16.msra.mxu0 %v764
    %1237 = vmatprep.subr.bf16.mxu0 0
    %1238 = vmatpush1.bf16.msra.mxu0 %v765
    %1239 = vmatprep.subr.bf16.mxu0 0
    %1240 = vmatpush1.bf16.msra.mxu0 %v766
    %1241 = vmatprep.subr.bf16.mxu0 0
    %1242 = vmatpush1.bf16.msra.mxu0 %v767
    %1243 = vmatprep.subr.bf16.mxu0 0
    %1244 = vmatpush1.bf16.msra.mxu0 %v768
    %1245 = vmatprep.subr.bf16.mxu0 0
    %1246 = vmatpush1.bf16.msra.mxu0 0
    %1247 = vmatprep.subr.bf16.mxu0 0
    %1248 = vmatpush1.bf16.msra.mxu0 0
    %1249 = vmatprep.subr.bf16.mxu0 0
    %1250 = vmatpush1.bf16.msra.mxu0 0
    %1251 = vmatprep.subr.bf16.mxu0 0
    %1252 = vmatpush1.bf16.msra.mxu0 0
    %1253 = vmatprep.subr.bf16.mxu0 0
    %1254 = vmatpush1.bf16.msra.mxu0 0
    %1255 = vmatprep.subr.bf16.mxu0 0
    %1256 = vmatpush1.bf16.msra.mxu0 0
    %1257 = vmatprep.subr.bf16.mxu0 0
    %1258 = vmatpush1.bf16.msra.mxu0 0
    %1259 = vmatprep.subr.bf16.mxu0 0
    %1260 = vmatpush1.bf16.msra.mxu0 0
    %1261 = vmatprep.mubr.bf16.mxu0 0
    %1262 = vmatmul.mubr.bf16.gmra.mrb[0].mxu0 %v228
    %v1263 = vpop.f32.mrb[0].mxu0
    %v1264 = vadd.f32 %v1167, %v1263
    %v1265 = vpop.f32.mrb[0].mxu0
    %v1266 = vpop.f32.mrb[0].mxu0
    %v1267 = vadd.f32 %v1170, %v1266
    %v1268 = vpop.f32.mrb[0].mxu0
    %1269 = vmatprep.mubr.bf16.mxu0 0
    %1270 = vmatmul.mubr.bf16.gmra.mrb[0].mxu0 %v229
    %v1271 = vpop.f32.mrb[0].mxu0
    %v1272 = vadd.f32 %v1175, %v1271
    %v1273 = vpop.f32.mrb[0].mxu0
    %v1274 = vpop.f32.mrb[0].mxu0
    %v1275 = vadd.f32 %v1178, %v1274
    %v1276 = vpop.f32.mrb[0].mxu0
    %1277 = vmatprep.mubr.bf16.mxu0 0
    %1278 = vmatmul.mubr.bf16.gmra.mrb[0].mxu0 %v230
    %v1279 = vpop.f32.mrb[0].mxu0
    %v1280 = vadd.f32 %v1183, %v1279
    %v1281 = vpop.f32.mrb[0].mxu0
    %v1282 = vpop.f32.mrb[0].mxu0
    %v1283 = vadd.f32 %v1186, %v1282
    %v1284 = vpop.f32.mrb[0].mxu0
    %1285 = vmatprep.mubr.bf16.mxu0 0
    %1286 = vmatmul.mubr.bf16.gmra.mrb[0].mxu0 %v263
    %v1287 = vpop.f32.mrb[0].mxu0
    %v1288 = vadd.f32 %v1191, %v1287
    %v1289 = vpop.f32.mrb[0].mxu0
    %v1290 = vpop.f32.mrb[0].mxu0
    %v1291 = vadd.f32 %v1194, %v1290
    %v1292 = vpop.f32.mrb[0].mxu0
    %1293 = vmatprep.mubr.bf16.mxu0 0
    %1294 = vmatmul.mubr.bf16.gmra.mrb[0].mxu0 %v232
    %v1295 = vpop.f32.mrb[0].mxu0
    %v1296 = vadd.f32 %v1199, %v1295
    %v1297 = vpop.f32.mrb[0].mxu0
    %v1298 = vpop.f32.mrb[0].mxu0
    %v1299 = vadd.f32 %v1202, %v1298
    %v1300 = vpop.f32.mrb[0].mxu0
    %1301 = vmatprep.mubr.bf16.mxu0 0
    %1302 = vmatmul.mubr.bf16.gmra.mrb[0].mxu0 %v233
    %v1303 = vpop.f32.mrb[0].mxu0
    %v1304 = vadd.f32 %v1207, %v1303
    %v1305 = vpop.f32.mrb[0].mxu0
    %v1306 = vpop.f32.mrb[0].mxu0
    %v1307 = vadd.f32 %v1210, %v1306
    %v1308 = vpop.f32.mrb[0].mxu0
    %1309 = vmatprep.mubr.bf16.mxu0 0
    %1310 = vmatmul.mubr.bf16.gmra.mrb[0].mxu0 %v234
    %v1311 = vpop.f32.mrb[0].mxu0
    %v1312 = vadd.f32 %v1215, %v1311
    %v1313 = vpop.f32.mrb[0].mxu0
    %v1314 = vpop.f32.mrb[0].mxu0
    %v1315 = vadd.f32 %v1218, %v1314
    %v1316 = vpop.f32.mrb[0].mxu0
    %1317 = vmatprep.mubr.bf16.mxu0 0
    %1318 = vmatmul.mubr.bf16.gmra.mrb[0].mxu0 %v264
    %v1319 = vpop.f32.mrb[0].mxu0
    %v1320 = vadd.f32 %v1223, %v1319
    %v1321 = vpop.f32.mrb[0].mxu0
    %v1322 = vpop.f32.mrb[0].mxu0
    %v1323 = vadd.f32 %v1226, %v1322
    %v1324 = vpop.f32.mrb[0].mxu0
    %1325 = vdwg.mxu0
    %v1326 = vld [vmem:[%s2] sm:$0x1]
    %v1327 = vld [vmem:[%s3] sm:$0x1]
    %v1328 = vadd.f32 %v1264, %v1267
    %v1329 = vadd.f32 %v1328, %v1272
    %v1330 = vadd.f32 %v1329, %v1275
    %v1331 = vadd.f32 %v1330, %v1280
    %v1332 = vadd.f32 %v1331, %v1283
    %v1333 = vadd.f32 %v1332, %v1288
    %v1334 = vadd.f32 %v1333, %v1291
    %v1335 = vadd.f32 %v1334, %v1296
    %v1336 = vadd.f32 %v1335, %v1299
    %v1337 = vadd.f32 %v1336, %v1304
    %v1338 = vadd.f32 %v1337, %v1307
    %v1339 = vadd.f32 %v1338, %v1312
    %v1340 = vadd.f32 %v1339, %v1315
    %v1341 = vadd.f32 %v1340, %v1320
    %v1342 = vadd.f32 %v1341, %v1323
    %v1343 = vrot.slane %v1342, 4
    %v1344 = vadd.f32 %v1342, %v1343
    %v1345 = vrot.slane %v1344, 2
    %v1346 = vadd.f32 %v1344, %v1345
    %v1347 = vrot.slane %v1346, 1
    %v1348 = vadd.f32 %v1346, %v1347
    %v1349 = vmul.f32 %v1348, 0.0078125
    %v1350 = vsub.f32 %v1264, %v1349
    %v1351 = vsub.f32 %v1267, %v1349
    %v1352 = vsub.f32 %v1272, %v1349
    %v1353 = vsub.f32 %v1275, %v1349
    %v1354 = vsub.f32 %v1280, %v1349
    %v1355 = vsub.f32 %v1283, %v1349
    %v1356 = vsub.f32 %v1288, %v1349
    %v1357 = vsub.f32 %v1291, %v1349
    %v1358 = vsub.f32 %v1296, %v1349
    %v1359 = vsub.f32 %v1299, %v1349
    %v1360 = vsub.f32 %v1304, %v1349
    %v1361 = vsub.f32 %v1307, %v1349
    %v1362 = vsub.f32 %v1312, %v1349
    %v1363 = vsub.f32 %v1315, %v1349
    %v1364 = vsub.f32 %v1320, %v1349
    %v1365 = vsub.f32 %v1323, %v1349
    %v1366 = vmul.f32 %v1350, %v1350
    %v1367 = vmul.f32 %v1351, %v1351
    %v1368 = vmul.f32 %v1352, %v1352
    %v1369 = vmul.f32 %v1353, %v1353
    %v1370 = vmul.f32 %v1354, %v1354
    %v1371 = vmul.f32 %v1355, %v1355
    %v1372 = vmul.f32 %v1356, %v1356
    %v1373 = vmul.f32 %v1357, %v1357
    %v1374 = vmul.f32 %v1358, %v1358
    %v1375 = vmul.f32 %v1359, %v1359
    %v1376 = vmul.f32 %v1360, %v1360
    %v1377 = vmul.f32 %v1361, %v1361
    %v1378 = vmul.f32 %v1362, %v1362
    %v1379 = vmul.f32 %v1363, %v1363
    %v1380 = vmul.f32 %v1364, %v1364
    %v1381 = vmul.f32 %v1365, %v1365
    %v1382 = vadd.f32 %v1366, %v1367
    %v1383 = vadd.f32 %v1382, %v1368
    %v1384 = vadd.f32 %v1383, %v1369
    %v1385 = vadd.f32 %v1384, %v1370
    %v1386 = vadd.f32 %v1385, %v1371
    %v1387 = vadd.f32 %v1386, %v1372
    %v1388 = vadd.f32 %v1387, %v1373
    %v1389 = vadd.f32 %v1388, %v1374
    %v1390 = vadd.f32 %v1389, %v1375
    %v1391 = vadd.f32 %v1390, %v1376
    %v1392 = vadd.f32 %v1391, %v1377
    %v1393 = vadd.f32 %v1392, %v1378
    %v1394 = vadd.f32 %v1393, %v1379
    %v1395 = vadd.f32 %v1394, %v1380
    %v1396 = vadd.f32 %v1395, %v1381
    %v1397 = vrot.slane %v1396, 4
    %v1398 = vadd.f32 %v1396, %v1397
    %v1399 = vrot.slane %v1398, 2
    %v1400 = vadd.f32 %v1398, %v1399
    %v1401 = vrot.slane %v1400, 1
    %v1402 = vadd.f32 %v1400, %v1401
    %v1403 = vmul.f32 %v1402, 0.0078125
    %v1404 = vadd.f32 %v1403, 1e-05
    %v1405 = vrsqrt.pop %v1404
    %v1406 = vmul.f32 %v1326, %v1405
    %v1408 = vlaneseq
    %v1409 = vshrl.u32 %v1408, 7
    %v1410 = vsub.s32 0, %v1409
    %v1411 = vrot.slane %v1406, %v1410
    %v1413 = vmul.f32 %v1350, %v1411
    %v1414 = vmul.f32 %v1351, %v1411
    %v1415 = vmul.f32 %v1352, %v1411
    %v1416 = vmul.f32 %v1353, %v1411
    %v1417 = vmul.f32 %v1354, %v1411
    %v1418 = vmul.f32 %v1355, %v1411
    %v1419 = vmul.f32 %v1356, %v1411
    %v1420 = vmul.f32 %v1357, %v1411
    %v1421 = vmul.f32 %v1358, %v1411
    %v1422 = vmul.f32 %v1359, %v1411
    %v1423 = vmul.f32 %v1360, %v1411
    %v1424 = vmul.f32 %v1361, %v1411
    %v1425 = vmul.f32 %v1362, %v1411
    %v1426 = vmul.f32 %v1363, %v1411
    %v1427 = vmul.f32 %v1364, %v1411
    %v1428 = vmul.f32 %v1365, %v1411
    %v1430 = vlaneseq
    %v1431 = vshrl.u32 %v1430, 7
    %v1432 = vsub.s32 0, %v1431
    %v1433 = vrot.slane %v1327, %v1432
    %v1435 = vadd.f32 %v1413, %v1433
    %v1436 = vadd.f32 %v1414, %v1433
    %v1437 = vadd.f32 %v1415, %v1433
    %v1438 = vadd.f32 %v1416, %v1433
    %v1439 = vadd.f32 %v1417, %v1433
    %v1440 = vadd.f32 %v1418, %v1433
    %v1441 = vadd.f32 %v1419, %v1433
    %v1442 = vadd.f32 %v1420, %v1433
    %v1443 = vadd.f32 %v1421, %v1433
    %v1444 = vadd.f32 %v1422, %v1433
    %v1445 = vadd.f32 %v1423, %v1433
    %v1446 = vadd.f32 %v1424, %v1433
    %v1447 = vadd.f32 %v1425, %v1433
    %v1448 = vadd.f32 %v1426, %v1433
    %v1449 = vadd.f32 %v1427, %v1433
    %v1450 = vadd.f32 %v1428, %v1433
    %v1451 = vmax.f32 %v1435, 0.0
    %v1452 = vmax.f32 %v1436, 0.0
    %v1453 = vmax.f32 %v1437, 0.0
    %v1454 = vmax.f32 %v1438, 0.0
    %v1455 = vmax.f32 %v1439, 0.0
    %v1456 = vmax.f32 %v1440, 0.0
    %v1457 = vmax.f32 %v1441, 0.0
    %v1458 = vmax.f32 %v1442, 0.0
    %v1459 = vmax.f32 %v1443, 0.0
    %v1460 = vmax.f32 %v1444, 0.0
    %v1461 = vmax.f32 %v1445, 0.0
    %v1462 = vmax.f32 %v1446, 0.0
    %v1463 = vmax.f32 %v1447, 0.0
    %v1464 = vmax.f32 %v1448, 0.0
    %v1465 = vmax.f32 %v1449, 0.0
    %v1466 = vmax.f32 %v1450, 0.0
    %1467 = vst [vmem:[%s134 + $0x1] sm:$0xff] %v1451
    %1468 = vst [vmem:[%s134 + $0x11] sm:$0xff] %v1452
    %1469 = vst [vmem:[%s134 + $0x21] sm:$0xff] %v1453
    %1470 = vst [vmem:[%s134 + $0x31] sm:$0xff] %v1454
    %1471 = vst [vmem:[%s134 + $0x41] sm:$0xff] %v1455
    %1472 = vst [vmem:[%s134 + $0x51] sm:$0xff] %v1456
    %1473 = vst [vmem:[%s134 + $0x61] sm:$0xff] %v1457
    %1474 = vst [vmem:[%s134 + $0x71] sm:$0xff] %v1458
    %1475 = vst [vmem:[%s134 + $0xa1] sm:$0xff] %v1459
    %1476 = vst [vmem:[%s134 + $0xb1] sm:$0xff] %v1460
    %1477 = vst [vmem:[%s134 + $0xc1] sm:$0xff] %v1461
    %1478 = vst [vmem:[%s134 + $0xd1] sm:$0xff] %v1462
    %1479 = vst [vmem:[%s134 + $0xe1] sm:$0xff] %v1463
    %1480 = vst [vmem:[%s134 + $0xf1] sm:$0xff] %v1464
    %1481 = vst [vmem:[%s134 + $0x101] sm:$0xff] %v1465
    %1482 = vst [vmem:[%s134 + $0x111] sm:$0xff] %v1466
    %v1483 = vld [vmem:[#allocation2] sm:$0xff]
    %v1484 = vld [vmem:[#allocation2 + $0x10] sm:$0xff]
    %v1485 = vld [vmem:[#allocation2 + $0x20] sm:$0xff]
    %v1486 = vld [vmem:[#allocation2 + $0x30] sm:$0xff]
    %v1487 = vld [vmem:[#allocation2 + $0x40] sm:$0xff]
    %v1488 = vld [vmem:[#allocation2 + $0x50] sm:$0xff]
    %v1489 = vld [vmem:[#allocation2 + $0x60] sm:$0xff]
    %v1490 = vld [vmem:[#allocation2 + $0x70] sm:$0xff]
    %v1491 = vld [vmem:[#allocation2 + $0x80] sm:$0xff]
    %v1492 = vld [vmem:[#allocation2 + $0x90] sm:$0xff]
    %v1493 = vld [vmem:[#allocation2 + $0xa0] sm:$0xff]
    %v1494 = vld [vmem:[#allocation2 + $0xb0] sm:$0xff]
    %v1495 = vld [vmem:[#allocation2 + $0xc0] sm:$0xff]
    %v1496 = vld [vmem:[#allocation2 + $0xd0] sm:$0xff]
    %v1497 = vld [vmem:[#allocation2 + $0xe0] sm:$0xff]
    %v1498 = vld [vmem:[#allocation2 + $0xf0] sm:$0xff]
    %v1499 = vld [vmem:[#allocation2 + $0x100] sm:$0xff]
    %v1500 = vld [vmem:[#allocation2 + $0x110] sm:$0xff]
    %v1501 = vld [vmem:[#allocation2 + $0x120] sm:$0xff]
    %v1502 = vld [vmem:[#allocation2 + $0x130] sm:$0xff]
    %v1503 = vld [vmem:[#allocation2 + $0x1] sm:$0xff]
    %v1504 = vld [vmem:[#allocation2 + $0x11] sm:$0xff]
    %v1505 = vld [vmem:[#allocation2 + $0x21] sm:$0xff]
    %v1506 = vld [vmem:[#allocation2 + $0x31] sm:$0xff]
    %v1507 = vld [vmem:[#allocation2 + $0x41] sm:$0xff]
    %v1508 = vld [vmem:[#allocation2 + $0x51] sm:$0xff]
    %v1509 = vld [vmem:[#allocation2 + $0x61] sm:$0xff]
    %v1510 = vld [vmem:[#allocation2 + $0x71] sm:$0xff]
    %v1511 = vld [vmem:[#allocation2 + $0x81] sm:$0xff]
    %v1512 = vld [vmem:[#allocation2 + $0x91] sm:$0xff]
    %v1513 = vld [vmem:[#allocation2 + $0xa1] sm:$0xff]
    %v1514 = vld [vmem:[#allocation2 + $0xb1] sm:$0xff]
    %v1515 = vld [vmem:[#allocation2 + $0xc1] sm:$0xff]
    %v1516 = vld [vmem:[#allocation2 + $0xd1] sm:$0xff]
    %v1517 = vld [vmem:[#allocation2 + $0xe1] sm:$0xff]
    %v1518 = vld [vmem:[#allocation2 + $0xf1] sm:$0xff]
    %v1519 = vld [vmem:[#allocation2 + $0x101] sm:$0xff]
    %v1520 = vld [vmem:[#allocation2 + $0x111] sm:$0xff]
    %v1521 = vld [vmem:[#allocation2 + $0x121] sm:$0xff]
    %v1522 = vld [vmem:[#allocation2 + $0x131] sm:$0xff]
    %v1523 = vld [vmem:[#allocation2 + $0x2] sm:$0xff]
    %v1524 = vld [vmem:[#allocation2 + $0x12] sm:$0xff]
    %v1525 = vld [vmem:[#allocation2 + $0x22] sm:$0xff]
    %v1526 = vld [vmem:[#allocation2 + $0x32] sm:$0xff]
    %v1527 = vld [vmem:[#allocation2 + $0x42] sm:$0xff]
    %v1528 = vld [vmem:[#allocation2 + $0x52] sm:$0xff]
    %v1529 = vld [vmem:[#allocation2 + $0x62] sm:$0xff]
    %v1530 = vld [vmem:[#allocation2 + $0x72] sm:$0xff]
    %v1531 = vld [vmem:[#allocation2 + $0x82] sm:$0xff]
    %v1532 = vld [vmem:[#allocation2 + $0x92] sm:$0xff]
    %v1533 = vld [vmem:[#allocation2 + $0xa2] sm:$0xff]
    %v1534 = vld [vmem:[#allocation2 + $0xb2] sm:$0xff]
    %v1535 = vld [vmem:[#allocation2 + $0xc2] sm:$0xff]
    %v1536 = vld [vmem:[#allocation2 + $0xd2] sm:$0xff]
    %v1537 = vld [vmem:[#allocation2 + $0xe2] sm:$0xff]
    %v1538 = vld [vmem:[#allocation2 + $0xf2] sm:$0xff]
    %v1539 = vld [vmem:[#allocation2 + $0x102] sm:$0xff]
    %v1540 = vld [vmem:[#allocation2 + $0x112] sm:$0xff]
    %v1541 = vld [vmem:[#allocation2 + $0x122] sm:$0xff]
    %v1542 = vld [vmem:[#allocation2 + $0x132] sm:$0xff]
    %v1543 = vpack.c.bf16 %v1484, %v1483
    %v1544 = vpack.c.bf16 %v1486, %v1485
    %v1545 = vpack.c.bf16 %v1488, %v1487
    %v1546 = vpack.c.bf16 %v1490, %v1489
    %v1547 = vpack.c.bf16 %v1494, %v1493
    %v1548 = vpack.c.bf16 %v1496, %v1495
    %v1549 = vpack.c.bf16 %v1498, %v1497
    %v1550 = vpack.c.bf16 %v1500, %v1499
    %v1551 = vpack.c.bf16 %v1504, %v1503
    %v1552 = vpack.c.bf16 %v1506, %v1505
    %v1553 = vpack.c.bf16 %v1508, %v1507
    %v1554 = vpack.c.bf16 %v1510, %v1509
    %v1555 = vpack.c.bf16 %v1514, %v1513
    %v1556 = vpack.c.bf16 %v1516, %v1515
    %v1557 = vpack.c.bf16 %v1518, %v1517
    %v1558 = vpack.c.bf16 %v1520, %v1519
    %v1559 = vpack.c.bf16 %v1524, %v1523
    %v1560 = vpack.c.bf16 %v1526, %v1525
    %v1561 = vpack.c.bf16 %v1528, %v1527
    %v1562 = vpack.c.bf16 %v1530, %v1529
    %v1563 = vpack.c.bf16 %v1534, %v1533
    %v1564 = vpack.c.bf16 %v1536, %v1535
    %v1565 = vpack.c.bf16 %v1538, %v1537
    %v1566 = vpack.c.bf16 %v1540, %v1539
    %v1567 = vpack.c.bf16 %v1485, %v1484
    %v1568 = vpack.c.bf16 %v1487, %v1486
    %v1569 = vpack.c.bf16 %v1489, %v1488
    %v1570 = vpack.c.bf16 %v1491, %v1490
    %v1571 = vpack.c.bf16 %v1495, %v1494
    %v1572 = vpack.c.bf16 %v1497, %v1496
    %v1573 = vpack.c.bf16 %v1499, %v1498
    %v1574 = vpack.c.bf16 %v1501, %v1500
    %v1575 = vpack.c.bf16 %v1505, %v1504
    %v1576 = vpack.c.bf16 %v1507, %v1506
    %v1577 = vpack.c.bf16 %v1509, %v1508
    %v1578 = vpack.c.bf16 %v1511, %v1510
    %v1579 = vpack.c.bf16 %v1515, %v1514
    %v1580 = vpack.c.bf16 %v1517, %v1516
    %v1581 = vpack.c.bf16 %v1519, %v1518
    %v1582 = vpack.c.bf16 %v1521, %v1520
    %v1583 = vpack.c.bf16 %v1525, %v1524
    %v1584 = vpack.c.bf16 %v1527, %v1526
    %v1585 = vpack.c.bf16 %v1529, %v1528
    %v1586 = vpack.c.bf16 %v1531, %v1530
    %v1587 = vpack.c.bf16 %v1535, %v1534
    %v1588 = vpack.c.bf16 %v1537, %v1536
    %v1589 = vpack.c.bf16 %v1539, %v1538
    %v1590 = vpack.c.bf16 %v1541, %v1540
    %v1591 = vpack.c.bf16 %v1492, %v1491
    %v1592 = vpack.c.bf16 %v1502, %v1501
    %v1593 = vpack.c.bf16 %v1512, %v1511
    %v1594 = vpack.c.bf16 %v1522, %v1521
    %v1595 = vpack.c.bf16 %v1532, %v1531
    %v1596 = vpack.c.bf16 %v1542, %v1541
    %v1597 = vld [vmem:[#allocation8] sm:$0xf]
    %v1598 = vld [vmem:[#allocation8 + $0x4] sm:$0xf]
    %v1599 = vld [vmem:[#allocation8 + $0x8] sm:$0xf]
    %v1600 = vld [vmem:[#allocation8 + $0xc] sm:$0xf]
    %v1601 = vld [vmem:[#allocation8 + $0x10] sm:$0xf]
    %v1602 = vld [vmem:[#allocation8 + $0x14] sm:$0xf]
    %v1603 = vld [vmem:[#allocation8 + $0x18] sm:$0xf]
    %v1604 = vld [vmem:[#allocation8 + $0x1c] sm:$0xf]
    %v1605 = vld [vmem:[#allocation8 + $0x20] sm:$0xf]
    %v1606 = vld [vmem:[#allocation8 + $0x24] sm:$0xf]
    %v1607 = vld [vmem:[#allocation8 + $0x28] sm:$0xf]
    %v1608 = vld [vmem:[#allocation8 + $0x2c] sm:$0xf]
    %v1609 = vld [vmem:[#allocation8 + $0x30] sm:$0xf]
    %v1610 = vld [vmem:[#allocation8 + $0x34] sm:$0xf]
    %v1611 = vld [vmem:[#allocation8 + $0x38] sm:$0xf]
    %v1612 = vld [vmem:[#allocation8 + $0x3c] sm:$0xf]
    %v1613 = vld [vmem:[#allocation8 + $0x40] sm:$0xf]
    %v1614 = vld [vmem:[#allocation8 + $0x44] sm:$0xf]
    %v1615 = vld [vmem:[#allocation8 + $0x48] sm:$0xf]
    %v1616 = vld [vmem:[#allocation8 + $0x4c] sm:$0xf]
    %v1617 = vld [vmem:[#allocation8 + $0x50] sm:$0xf]
    %v1618 = vld [vmem:[#allocation8 + $0x54] sm:$0xf]
    %v1619 = vld [vmem:[#allocation8 + $0x58] sm:$0xf]
    %v1620 = vld [vmem:[#allocation8 + $0x5c] sm:$0xf]
    %v1621 = vld [vmem:[#allocation8 + $0x60] sm:$0xf]
    %v1622 = vld [vmem:[#allocation8 + $0x64] sm:$0xf]
    %v1623 = vld [vmem:[#allocation8 + $0x68] sm:$0xf]
    %v1624 = vld [vmem:[#allocation8 + $0x6c] sm:$0xf]
    %v1625 = vld [vmem:[#allocation8 + $0x70] sm:$0xf]
    %v1626 = vld [vmem:[#allocation8 + $0x74] sm:$0xf]
    %v1627 = vld [vmem:[#allocation8 + $0x78] sm:$0xf]
    %v1628 = vld [vmem:[#allocation8 + $0x7c] sm:$0xf]
    %v1629 = vld [vmem:[#allocation8 + $0x80] sm:$0xf]
    %v1630 = vld [vmem:[#allocation8 + $0x84] sm:$0xf]
    %v1631 = vld [vmem:[#allocation8 + $0x88] sm:$0xf]
    %v1632 = vld [vmem:[#allocation8 + $0x8c] sm:$0xf]
    %v1633 = vld [vmem:[#allocation8 + $0x90] sm:$0xf]
    %v1634 = vld [vmem:[#allocation8 + $0x94] sm:$0xf]
    %v1635 = vld [vmem:[#allocation8 + $0x98] sm:$0xf]
    %v1636 = vld [vmem:[#allocation8 + $0x9c] sm:$0xf]
    %v1637 = vld [vmem:[#allocation8 + $0xa0] sm:$0xf]
    %v1638 = vld [vmem:[#allocation8 + $0xa4] sm:$0xf]
    %v1639 = vld [vmem:[#allocation8 + $0xa8] sm:$0xf]
    %v1640 = vld [vmem:[#allocation8 + $0xac] sm:$0xf]
    %v1641 = vld [vmem:[#allocation8 + $0xb0] sm:$0xf]
    %v1642 = vld [vmem:[#allocation8 + $0xb4] sm:$0xf]
    %v1643 = vld [vmem:[#allocation8 + $0xb8] sm:$0xf]
    %v1644 = vld [vmem:[#allocation8 + $0xbc] sm:$0xf]
    %v1645 = vld [vmem:[#allocation8 + $0xc0] sm:$0xf]
    %v1646 = vld [vmem:[#allocation8 + $0xc4] sm:$0xf]
    %v1647 = vld [vmem:[#allocation8 + $0xc8] sm:$0xf]
    %v1648 = vld [vmem:[#allocation8 + $0xcc] sm:$0xf]
    %v1649 = vld [vmem:[#allocation8 + $0xd0] sm:$0xf]
    %v1650 = vld [vmem:[#allocation8 + $0xd4] sm:$0xf]
    %v1651 = vld [vmem:[#allocation8 + $0xd8] sm:$0xf]
    %v1652 = vld [vmem:[#allocation8 + $0xdc] sm:$0xf]
    %v1653 = vld [vmem:[#allocation8 + $0xe0] sm:$0xf]
    %v1654 = vld [vmem:[#allocation8 + $0xe4] sm:$0xf]
    %v1655 = vld [vmem:[#allocation8 + $0xe8] sm:$0xf]
    %v1656 = vld [vmem:[#allocation8 + $0xec] sm:$0xf]
    %v1657 = vld [vmem:[#allocation8 + $0xf0] sm:$0xf]
    %v1658 = vld [vmem:[#allocation8 + $0xf4] sm:$0xf]
    %v1659 = vld [vmem:[#allocation8 + $0xf8] sm:$0xf]
    %v1660 = vld [vmem:[#allocation8 + $0xfc] sm:$0xf]
    %v1661 = vld [vmem:[#allocation8 + $0x100] sm:$0xf]
    %v1662 = vld [vmem:[#allocation8 + $0x104] sm:$0xf]
    %v1663 = vld [vmem:[#allocation8 + $0x108] sm:$0xf]
    %v1664 = vld [vmem:[#allocation8 + $0x10c] sm:$0xf]
    %v1665 = vld [vmem:[#allocation8 + $0x110] sm:$0xf]
    %v1666 = vld [vmem:[#allocation8 + $0x114] sm:$0xf]
    %v1667 = vld [vmem:[#allocation8 + $0x118] sm:$0xf]
    %v1668 = vld [vmem:[#allocation8 + $0x11c] sm:$0xf]
    %v1669 = vld [vmem:[#allocation8 + $0x120] sm:$0xf]
    %v1670 = vld [vmem:[#allocation8 + $0x124] sm:$0xf]
    %v1671 = vld [vmem:[#allocation8 + $0x128] sm:$0xf]
    %v1672 = vld [vmem:[#allocation8 + $0x12c] sm:$0xf]
    %v1673 = vld [vmem:[#allocation8 + $0x130] sm:$0xf]
    %v1674 = vld [vmem:[#allocation8 + $0x134] sm:$0xf]
    %v1675 = vld [vmem:[#allocation8 + $0x138] sm:$0xf]
    %v1676 = vld [vmem:[#allocation8 + $0x13c] sm:$0xf]
    %v1677 = vld [vmem:[#allocation8 + $0x140] sm:$0xf]
    %v1678 = vld [vmem:[#allocation8 + $0x144] sm:$0xf]
    %v1679 = vld [vmem:[#allocation8 + $0x148] sm:$0xf]
    %v1680 = vld [vmem:[#allocation8 + $0x14c] sm:$0xf]
    %v1681 = vld [vmem:[#allocation8 + $0x150] sm:$0xf]
    %v1682 = vld [vmem:[#allocation8 + $0x154] sm:$0xf]
    %v1683 = vld [vmem:[#allocation8 + $0x158] sm:$0xf]
    %v1684 = vld [vmem:[#allocation8 + $0x15c] sm:$0xf]
    %v1685 = vld [vmem:[#allocation8 + $0x160] sm:$0xf]
    %v1686 = vld [vmem:[#allocation8 + $0x164] sm:$0xf]
    %v1687 = vld [vmem:[#allocation8 + $0x168] sm:$0xf]
    %v1688 = vld [vmem:[#allocation8 + $0x16c] sm:$0xf]
    %v1689 = vld [vmem:[#allocation8 + $0x170] sm:$0xf]
    %v1690 = vld [vmem:[#allocation8 + $0x174] sm:$0xf]
    %v1691 = vld [vmem:[#allocation8 + $0x178] sm:$0xf]
    %v1692 = vld [vmem:[#allocation8 + $0x17c] sm:$0xf]
    %v1693 = vld [vmem:[#allocation8 + $0x180] sm:$0xf]
    %v1694 = vld [vmem:[#allocation8 + $0x184] sm:$0xf]
    %v1695 = vld [vmem:[#allocation8 + $0x188] sm:$0xf]
    %v1696 = vld [vmem:[#allocation8 + $0x18c] sm:$0xf]
    %v1697 = vld [vmem:[#allocation8 + $0x190] sm:$0xf]
    %v1698 = vld [vmem:[#allocation8 + $0x194] sm:$0xf]
    %v1699 = vld [vmem:[#allocation8 + $0x198] sm:$0xf]
    %v1700 = vld [vmem:[#allocation8 + $0x19c] sm:$0xf]
    %v1701 = vld [vmem:[#allocation8 + $0x1a0] sm:$0xf]
    %v1702 = vld [vmem:[#allocation8 + $0x1a4] sm:$0xf]
    %v1703 = vld [vmem:[#allocation8 + $0x1a8] sm:$0xf]
    %v1704 = vld [vmem:[#allocation8 + $0x1ac] sm:$0xf]
    %v1705 = vld [vmem:[#allocation8 + $0x1b0] sm:$0xf]
    %v1706 = vld [vmem:[#allocation8 + $0x1b4] sm:$0xf]
    %v1707 = vld [vmem:[#allocation8 + $0x1b8] sm:$0xf]
    %v1708 = vld [vmem:[#allocation8 + $0x1bc] sm:$0xf]
    %v1709 = vld [vmem:[#allocation8 + $0x1c0] sm:$0xf]
    %v1710 = vld [vmem:[#allocation8 + $0x1c4] sm:$0xf]
    %v1711 = vld [vmem:[#allocation8 + $0x1c8] sm:$0xf]
    %v1712 = vld [vmem:[#allocation8 + $0x1cc] sm:$0xf]
    %v1713 = vld [vmem:[#allocation8 + $0x1d0] sm:$0xf]
    %v1714 = vld [vmem:[#allocation8 + $0x1d4] sm:$0xf]
    %v1715 = vld [vmem:[#allocation8 + $0x1d8] sm:$0xf]
    %v1716 = vld [vmem:[#allocation8 + $0x1dc] sm:$0xf]
    %v1717 = vld [vmem:[#allocation8 + $0x1e0] sm:$0xf]
    %v1718 = vld [vmem:[#allocation8 + $0x1e4] sm:$0xf]
    %v1719 = vld [vmem:[#allocation8 + $0x1e8] sm:$0xf]
    %v1720 = vld [vmem:[#allocation8 + $0x1ec] sm:$0xf]
    %v1721 = vld [vmem:[#allocation8 + $0x1f0] sm:$0xf]
    %v1722 = vld [vmem:[#allocation8 + $0x1f4] sm:$0xf]
    %v1723 = vld [vmem:[#allocation8 + $0x1f8] sm:$0xf]
    %v1724 = vld [vmem:[#allocation8 + $0x1fc] sm:$0xf]
    %v1725 = vld [vmem:[#allocation8 + $0x200] sm:$0xf]
    %v1726 = vld [vmem:[#allocation8 + $0x204] sm:$0xf]
    %v1727 = vld [vmem:[#allocation8 + $0x208] sm:$0xf]
    %v1728 = vld [vmem:[#allocation8 + $0x20c] sm:$0xf]
    %v1729 = vld [vmem:[#allocation8 + $0x210] sm:$0xf]
    %v1730 = vld [vmem:[#allocation8 + $0x214] sm:$0xf]
    %v1731 = vld [vmem:[#allocation8 + $0x218] sm:$0xf]
    %v1732 = vld [vmem:[#allocation8 + $0x21c] sm:$0xf]
    %v1733 = vld [vmem:[#allocation8 + $0x220] sm:$0xf]
    %v1734 = vld [vmem:[#allocation8 + $0x224] sm:$0xf]
    %v1735 = vld [vmem:[#allocation8 + $0x228] sm:$0xf]
    %v1736 = vld [vmem:[#allocation8 + $0x22c] sm:$0xf]
    %v1737 = vld [vmem:[#allocation8 + $0x230] sm:$0xf]
    %v1738 = vld [vmem:[#allocation8 + $0x234] sm:$0xf]
    %v1739 = vld [vmem:[#allocation8 + $0x238] sm:$0xf]
    %v1740 = vld [vmem:[#allocation8 + $0x23c] sm:$0xf]
    %v1885 = vunpack.c.l.b16 %v1597
    %v1886 = vunpack.c.l.b16 %v1598
    %v1887 = vunpack.c.l.b16 %v1599
    %v1888 = vunpack.c.l.b16 %v1600
    %v1889 = vunpack.c.l.b16 %v1601
    %v1890 = vunpack.c.l.b16 %v1602
    %v1891 = vunpack.c.l.b16 %v1603
    %v1892 = vunpack.c.l.b16 %v1604
    %v1893 = vunpack.c.l.b16 %v1605
    %v1894 = vunpack.c.l.b16 %v1606
    %v1895 = vunpack.c.l.b16 %v1607
    %v1896 = vunpack.c.l.b16 %v1608
    %v1897 = vunpack.c.l.b16 %v1609
    %v1898 = vunpack.c.l.b16 %v1610
    %v1899 = vunpack.c.l.b16 %v1611
    %v1900 = vunpack.c.l.b16 %v1612
    %v1901 = vunpack.c.l.b16 %v1613
    %v1902 = vunpack.c.l.b16 %v1614
    %v1903 = vunpack.c.l.b16 %v1615
    %v1904 = vunpack.c.l.b16 %v1616
    %v1905 = vunpack.c.l.b16 %v1617
    %v1906 = vunpack.c.l.b16 %v1618
    %v1907 = vunpack.c.l.b16 %v1619
    %v1908 = vunpack.c.l.b16 %v1620
    %v1909 = vunpack.c.l.b16 %v1621
    %v1910 = vunpack.c.l.b16 %v1622
    %v1911 = vunpack.c.l.b16 %v1623
    %v1912 = vunpack.c.l.b16 %v1624
    %v1913 = vunpack.c.l.b16 %v1625
    %v1914 = vunpack.c.l.b16 %v1626
    %v1915 = vunpack.c.l.b16 %v1627
    %v1916 = vunpack.c.l.b16 %v1628
    %v1917 = vunpack.c.l.b16 %v1629
    %v1918 = vunpack.c.l.b16 %v1630
    %v1919 = vunpack.c.l.b16 %v1631
    %v1920 = vunpack.c.l.b16 %v1632
    %v1921 = vunpack.c.l.b16 %v1633
    %v1922 = vunpack.c.l.b16 %v1634
    %v1923 = vunpack.c.l.b16 %v1635
    %v1924 = vunpack.c.l.b16 %v1636
    %v1925 = vunpack.c.l.b16 %v1637
    %v1926 = vunpack.c.l.b16 %v1638
    %v1927 = vunpack.c.l.b16 %v1639
    %v1928 = vunpack.c.l.b16 %v1640
    %v1929 = vunpack.c.l.b16 %v1641
    %v1930 = vunpack.c.l.b16 %v1642
    %v1931 = vunpack.c.l.b16 %v1643
    %v1932 = vunpack.c.l.b16 %v1644
    %v1933 = vunpack.c.l.b16 %v1645
    %v1934 = vunpack.c.l.b16 %v1646
    %v1935 = vunpack.c.l.b16 %v1647
    %v1936 = vunpack.c.l.b16 %v1648
    %v1937 = vunpack.c.l.b16 %v1649
    %v1938 = vunpack.c.l.b16 %v1650
    %v1939 = vunpack.c.l.b16 %v1651
    %v1940 = vunpack.c.l.b16 %v1652
    %v1941 = vunpack.c.l.b16 %v1653
    %v1942 = vunpack.c.l.b16 %v1654
    %v1943 = vunpack.c.l.b16 %v1655
    %v1944 = vunpack.c.l.b16 %v1656
    %v1945 = vunpack.c.l.b16 %v1657
    %v1946 = vunpack.c.l.b16 %v1658
    %v1947 = vunpack.c.l.b16 %v1659
    %v1948 = vunpack.c.l.b16 %v1660
    %v1949 = vunpack.c.l.b16 %v1661
    %v1950 = vunpack.c.l.b16 %v1662
    %v1951 = vunpack.c.l.b16 %v1663
    %v1952 = vunpack.c.l.b16 %v1664
    %v1953 = vunpack.c.l.b16 %v1665
    %v1954 = vunpack.c.l.b16 %v1666
    %v1955 = vunpack.c.l.b16 %v1667
    %v1956 = vunpack.c.l.b16 %v1668
    %v1957 = vunpack.c.l.b16 %v1669
    %v1958 = vunpack.c.l.b16 %v1670
    %v1959 = vunpack.c.l.b16 %v1671
    %v1960 = vunpack.c.l.b16 %v1672
    %v1961 = vunpack.c.l.b16 %v1673
    %v1962 = vunpack.c.l.b16 %v1674
    %v1963 = vunpack.c.l.b16 %v1675
    %v1964 = vunpack.c.l.b16 %v1676
    %v1965 = vunpack.c.l.b16 %v1677
    %v1966 = vunpack.c.l.b16 %v1678
    %v1967 = vunpack.c.l.b16 %v1679
    %v1968 = vunpack.c.l.b16 %v1680
    %v1969 = vunpack.c.l.b16 %v1681
    %v1970 = vunpack.c.l.b16 %v1682
    %v1971 = vunpack.c.l.b16 %v1683
    %v1972 = vunpack.c.l.b16 %v1684
    %v1973 = vunpack.c.l.b16 %v1685
    %v1974 = vunpack.c.l.b16 %v1686
    %v1975 = vunpack.c.l.b16 %v1687
    %v1976 = vunpack.c.l.b16 %v1688
    %v1977 = vunpack.c.l.b16 %v1689
    %v1978 = vunpack.c.l.b16 %v1690
    %v1979 = vunpack.c.l.b16 %v1691
    %v1980 = vunpack.c.l.b16 %v1692
    %v1981 = vunpack.c.l.b16 %v1693
    %v1982 = vunpack.c.l.b16 %v1694
    %v1983 = vunpack.c.l.b16 %v1695
    %v1984 = vunpack.c.l.b16 %v1696
    %v1985 = vunpack.c.l.b16 %v1697
    %v1986 = vunpack.c.l.b16 %v1698
    %v1987 = vunpack.c.l.b16 %v1699
    %v1988 = vunpack.c.l.b16 %v1700
    %v1989 = vunpack.c.l.b16 %v1701
    %v1990 = vunpack.c.l.b16 %v1702
    %v1991 = vunpack.c.l.b16 %v1703
    %v1992 = vunpack.c.l.b16 %v1704
    %v1993 = vunpack.c.l.b16 %v1705
    %v1994 = vunpack.c.l.b16 %v1706
    %v1995 = vunpack.c.l.b16 %v1707
    %v1996 = vunpack.c.l.b16 %v1708
    %v1997 = vunpack.c.l.b16 %v1709
    %v1998 = vunpack.c.l.b16 %v1710
    %v1999 = vunpack.c.l.b16 %v1711
    %v2000 = vunpack.c.l.b16 %v1712
    %v2001 = vunpack.c.l.b16 %v1713
    %v2002 = vunpack.c.l.b16 %v1714
    %v2003 = vunpack.c.l.b16 %v1715
    %v2004 = vunpack.c.l.b16 %v1716
    %v2005 = vunpack.c.l.b16 %v1717
    %v2006 = vunpack.c.l.b16 %v1718
    %v2007 = vunpack.c.l.b16 %v1719
    %v2008 = vunpack.c.l.b16 %v1720
    %v2009 = vunpack.c.l.b16 %v1721
    %v2010 = vunpack.c.l.b16 %v1722
    %v2011 = vunpack.c.l.b16 %v1723
    %v2012 = vunpack.c.l.b16 %v1724
    %v2013 = vunpack.c.l.b16 %v1725
    %v2014 = vunpack.c.l.b16 %v1726
    %v2015 = vunpack.c.l.b16 %v1727
    %v2016 = vunpack.c.l.b16 %v1728
    %v2017 = vunpack.c.l.b16 %v1729
    %v2018 = vunpack.c.l.b16 %v1730
    %v2019 = vunpack.c.l.b16 %v1731
    %v2020 = vunpack.c.l.b16 %v1732
    %v2021 = vunpack.c.l.b16 %v1733
    %v2022 = vunpack.c.l.b16 %v1734
    %v2023 = vunpack.c.l.b16 %v1735
    %v2024 = vunpack.c.l.b16 %v1736
    %v2025 = vunpack.c.l.b16 %v1737
    %v2026 = vunpack.c.l.b16 %v1738
    %v2027 = vunpack.c.l.b16 %v1739
    %v2028 = vunpack.c.l.b16 %v1740
    %v2029 = vpack.c.b16 %v1886, %v1885
    %v2030 = vpack.c.b16 %v1888, %v1887
    %v2031 = vpack.c.b16 %v1890, %v1889
    %v2032 = vpack.c.b16 %v1892, %v1891
    %v2033 = vpack.c.b16 %v1894, %v1893
    %v2034 = vpack.c.b16 %v1896, %v1895
    %v2035 = vpack.c.b16 %v1898, %v1897
    %v2036 = vpack.c.b16 %v1900, %v1899
    %v2037 = vpack.c.b16 %v1902, %v1901
    %v2038 = vpack.c.b16 %v1904, %v1903
    %v2039 = vpack.c.b16 %v1906, %v1905
    %v2040 = vpack.c.b16 %v1908, %v1907
    %v2041 = vpack.c.b16 %v1910, %v1909
    %v2042 = vpack.c.b16 %v1912, %v1911
    %v2043 = vpack.c.b16 %v1914, %v1913
    %v2044 = vpack.c.b16 %v1916, %v1915
    %v2045 = vpack.c.b16 %v1918, %v1917
    %v2046 = vpack.c.b16 %v1920, %v1919
    %v2047 = vpack.c.b16 %v1922, %v1921
    %v2048 = vpack.c.b16 %v1924, %v1923
    %v2049 = vpack.c.b16 %v1926, %v1925
    %v2050 = vpack.c.b16 %v1928, %v1927
    %v2051 = vpack.c.b16 %v1930, %v1929
    %v2052 = vpack.c.b16 %v1932, %v1931
    %v2053 = vpack.c.b16 %v1934, %v1933
    %v2054 = vpack.c.b16 %v1936, %v1935
    %v2055 = vpack.c.b16 %v1938, %v1937
    %v2056 = vpack.c.b16 %v1940, %v1939
    %v2057 = vpack.c.b16 %v1942, %v1941
    %v2058 = vpack.c.b16 %v1944, %v1943
    %v2059 = vpack.c.b16 %v1946, %v1945
    %v2060 = vpack.c.b16 %v1948, %v1947
    %v2061 = vpack.c.b16 %v1950, %v1949
    %v2062 = vpack.c.b16 %v1952, %v1951
    %v2063 = vpack.c.b16 %v1954, %v1953
    %v2064 = vpack.c.b16 %v1956, %v1955
    %v2065 = vpack.c.b16 %v1958, %v1957
    %v2066 = vpack.c.b16 %v1960, %v1959
    %v2067 = vpack.c.b16 %v1962, %v1961
    %v2068 = vpack.c.b16 %v1964, %v1963
    %v2069 = vpack.c.b16 %v1966, %v1965
    %v2070 = vpack.c.b16 %v1968, %v1967
    %v2071 = vpack.c.b16 %v1970, %v1969
    %v2072 = vpack.c.b16 %v1972, %v1971
    %v2073 = vpack.c.b16 %v1974, %v1973
    %v2074 = vpack.c.b16 %v1976, %v1975
    %v2075 = vpack.c.b16 %v1978, %v1977
    %v2076 = vpack.c.b16 %v1980, %v1979
    %v2077 = vpack.c.b16 %v1982, %v1981
    %v2078 = vpack.c.b16 %v1984, %v1983
    %v2079 = vpack.c.b16 %v1986, %v1985
    %v2080 = vpack.c.b16 %v1988, %v1987
    %v2081 = vpack.c.b16 %v1990, %v1989
    %v2082 = vpack.c.b16 %v1992, %v1991
    %v2083 = vpack.c.b16 %v1994, %v1993
    %v2084 = vpack.c.b16 %v1996, %v1995
    %v2085 = vpack.c.b16 %v1998, %v1997
    %v2086 = vpack.c.b16 %v2000, %v1999
    %v2087 = vpack.c.b16 %v2002, %v2001
    %v2088 = vpack.c.b16 %v2004, %v2003
    %v2089 = vpack.c.b16 %v2006, %v2005
    %v2090 = vpack.c.b16 %v2008, %v2007
    %v2091 = vpack.c.b16 %v2010, %v2009
    %v2092 = vpack.c.b16 %v2012, %v2011
    %v2093 = vpack.c.b16 %v2014, %v2013
    %v2094 = vpack.c.b16 %v2016, %v2015
    %v2095 = vpack.c.b16 %v2018, %v2017
    %v2096 = vpack.c.b16 %v2020, %v2019
    %v2097 = vpack.c.b16 %v2022, %v2021
    %v2098 = vpack.c.b16 %v2024, %v2023
    %v2099 = vpack.c.b16 %v2026, %v2025
    %v2100 = vpack.c.b16 %v2028, %v2027
    %2173 = vmatprep.subr.bf16.mxu0 0
    %2174 = vmatpush1.bf16.msra.mxu0 %v2029
    %2175 = vmatprep.subr.bf16.mxu0 0
    %2176 = vmatpush1.bf16.msra.mxu0 %v2030
    %2177 = vmatprep.subr.bf16.mxu0 0
    %2178 = vmatpush1.bf16.msra.mxu0 %v2031
    %2179 = vmatprep.subr.bf16.mxu0 0
    %2180 = vmatpush1.bf16.msra.mxu0 %v2032
    %2181 = vmatprep.subr.bf16.mxu0 0
    %2182 = vmatpush1.bf16.msra.mxu0 %v2033
    %2183 = vmatprep.subr.bf16.mxu0 0
    %2184 = vmatpush1.bf16.msra.mxu0 %v2034
    %2185 = vmatprep.subr.bf16.mxu0 0
    %2186 = vmatpush1.bf16.msra.mxu0 %v2035
    %2187 = vmatprep.subr.bf16.mxu0 0
    %2188 = vmatpush1.bf16.msra.mxu0 %v2036
    %2189 = vmatprep.subr.bf16.mxu0 0
    %2190 = vmatpush1.bf16.msra.mxu0 %v2037
    %2191 = vmatprep.subr.bf16.mxu0 0
    %2192 = vmatpush1.bf16.msra.mxu0 %v2038
    %2193 = vmatprep.subr.bf16.mxu0 0
    %2194 = vmatpush1.bf16.msra.mxu0 %v2039
    %2195 = vmatprep.subr.bf16.mxu0 0
    %2196 = vmatpush1.bf16.msra.mxu0 %v2040
    %2197 = vmatprep.subr.bf16.mxu0 0
    %2198 = vmatpush1.bf16.msra.mxu0 %v2041
    %2199 = vmatprep.subr.bf16.mxu0 0
    %2200 = vmatpush1.bf16.msra.mxu0 %v2042
    %2201 = vmatprep.subr.bf16.mxu0 0
    %2202 = vmatpush1.bf16.msra.mxu0 %v2043
    %2203 = vmatprep.subr.bf16.mxu0 0
    %2204 = vmatpush1.bf16.msra.mxu0 %v2044
    %2205 = vmatprep.mubr.bf16.mxu0 %v1551
    %2206 = vmatmul.mubr.bf16.gmra.mrb[0].mxu0 %v1543
    %v2207 = vpop.f32.mrb[0].mxu0
    %v2208 = vadd.f32 0.0, %v2207
    %v2209 = vpop.f32.mrb[0].mxu0
    %v2210 = vpop.f32.mrb[0].mxu0
    %v2211 = vadd.f32 0.0, %v2210
    %v2212 = vpop.f32.mrb[0].mxu0
    %2213 = vmatprep.mubr.bf16.mxu0 %v1552
    %2214 = vmatmul.mubr.bf16.gmra.mrb[0].mxu0 %v1544
    %v2215 = vpop.f32.mrb[0].mxu0
    %v2216 = vadd.f32 0.0, %v2215
    %v2217 = vpop.f32.mrb[0].mxu0
    %v2218 = vpop.f32.mrb[0].mxu0
    %v2219 = vadd.f32 0.0, %v2218
    %v2220 = vpop.f32.mrb[0].mxu0
    %2221 = vmatprep.mubr.bf16.mxu0 %v1553
    %2222 = vmatmul.mubr.bf16.gmra.mrb[0].mxu0 %v1545
    %v2223 = vpop.f32.mrb[0].mxu0
    %v2224 = vadd.f32 0.0, %v2223
    %v2225 = vpop.f32.mrb[0].mxu0
    %v2226 = vpop.f32.mrb[0].mxu0
    %v2227 = vadd.f32 0.0, %v2226
    %v2228 = vpop.f32.mrb[0].mxu0
    %2229 = vmatprep.mubr.bf16.mxu0 %v1554
    %2230 = vmatmul.mubr.bf16.gmra.mrb[0].mxu0 %v1546
    %v2231 = vpop.f32.mrb[0].mxu0
    %v2232 = vadd.f32 0.0, %v2231
    %v2233 = vpop.f32.mrb[0].mxu0
    %v2234 = vpop.f32.mrb[0].mxu0
    %v2235 = vadd.f32 0.0, %v2234
    %v2236 = vpop.f32.mrb[0].mxu0
    %2237 = vmatprep.mubr.bf16.mxu0 %v1555
    %2238 = vmatmul.mubr.bf16.gmra.mrb[0].mxu0 %v1547
    %v2239 = vpop.f32.mrb[0].mxu0
    %v2240 = vadd.f32 0.0, %v2239
    %v2241 = vpop.f32.mrb[0].mxu0
    %v2242 = vpop.f32.mrb[0].mxu0
    %v2243 = vadd.f32 0.0, %v2242
    %v2244 = vpop.f32.mrb[0].mxu0
    %2245 = vmatprep.mubr.bf16.mxu0 %v1556
    %2246 = vmatmul.mubr.bf16.gmra.mrb[0].mxu0 %v1548
    %v2247 = vpop.f32.mrb[0].mxu0
    %v2248 = vadd.f32 0.0, %v2247
    %v2249 = vpop.f32.mrb[0].mxu0
    %v2250 = vpop.f32.mrb[0].mxu0
    %v2251 = vadd.f32 0.0, %v2250
    %v2252 = vpop.f32.mrb[0].mxu0
    %2253 = vmatprep.mubr.bf16.mxu0 %v1557
    %2254 = vmatmul.mubr.bf16.gmra.mrb[0].mxu0 %v1549
    %v2255 = vpop.f32.mrb[0].mxu0
    %v2256 = vadd.f32 0.0, %v2255
    %v2257 = vpop.f32.mrb[0].mxu0
    %v2258 = vpop.f32.mrb[0].mxu0
    %v2259 = vadd.f32 0.0, %v2258
    %v2260 = vpop.f32.mrb[0].mxu0
    %2261 = vmatprep.mubr.bf16.mxu0 %v1558
    %2262 = vmatmul.mubr.bf16.gmra.mrb[0].mxu0 %v1550
    %v2263 = vpop.f32.mrb[0].mxu0
    %v2264 = vadd.f32 0.0, %v2263
    %v2265 = vpop.f32.mrb[0].mxu0
    %v2266 = vpop.f32.mrb[0].mxu0
    %v2267 = vadd.f32 0.0, %v2266
    %v2268 = vpop.f32.mrb[0].mxu0
    %2269 = vdwg.mxu0
    %2270 = vmatprep.subr.bf16.mxu0 0
    %2271 = vmatpush1.bf16.msra.mxu0 %v2045
    %2272 = vmatprep.subr.bf16.mxu0 0
    %2273 = vmatpush1.bf16.msra.mxu0 %v2046
    %2274 = vmatprep.subr.bf16.mxu0 0
    %2275 = vmatpush1.bf16.msra.mxu0 %v2047
    %2276 = vmatprep.subr.bf16.mxu0 0
    %2277 = vmatpush1.bf16.msra.mxu0 %v2048
    %2278 = vmatprep.subr.bf16.mxu0 0
    %2279 = vmatpush1.bf16.msra.mxu0 %v2049
    %2280 = vmatprep.subr.bf16.mxu0 0
    %2281 = vmatpush1.bf16.msra.mxu0 %v2050
    %2282 = vmatprep.subr.bf16.mxu0 0
    %2283 = vmatpush1.bf16.msra.mxu0 %v2051
    %2284 = vmatprep.subr.bf16.mxu0 0
    %2285 = vmatpush1.bf16.msra.mxu0 %v2052
    %2286 = vmatprep.subr.bf16.mxu0 0
    %2287 = vmatpush1.bf16.msra.mxu0 %v2053
    %2288 = vmatprep.subr.bf16.mxu0 0
    %2289 = vmatpush1.bf16.msra.mxu0 %v2054
    %2290 = vmatprep.subr.bf16.mxu0 0
    %2291 = vmatpush1.bf16.msra.mxu0 %v2055
    %2292 = vmatprep.subr.bf16.mxu0 0
    %2293 = vmatpush1.bf16.msra.mxu0 %v2056
    %2294 = vmatprep.subr.bf16.mxu0 0
    %2295 = vmatpush1.bf16.msra.mxu0 %v2057
    %2296 = vmatprep.subr.bf16.mxu0 0
    %2297 = vmatpush1.bf16.msra.mxu0 %v2058
    %2298 = vmatprep.subr.bf16.mxu0 0
    %2299 = vmatpush1.bf16.msra.mxu0 %v2059
    %2300 = vmatprep.subr.bf16.mxu0 0
    %2301 = vmatpush1.bf16.msra.mxu0 %v2060
    %2302 = vmatprep.mubr.bf16.mxu0 %v1567
    %2303 = vmatmul.mubr.bf16.gmra.mrb[0].mxu0 %v1559
    %v2304 = vpop.f32.mrb[0].mxu0
    %v2305 = vadd.f32 %v2208, %v2304
    %v2306 = vpop.f32.mrb[0].mxu0
    %v2307 = vpop.f32.mrb[0].mxu0
    %v2308 = vadd.f32 %v2211, %v2307
    %v2309 = vpop.f32.mrb[0].mxu0
    %2310 = vmatprep.mubr.bf16.mxu0 %v1568
    %2311 = vmatmul.mubr.bf16.gmra.mrb[0].mxu0 %v1560
    %v2312 = vpop.f32.mrb[0].mxu0
    %v2313 = vadd.f32 %v2216, %v2312
    %v2314 = vpop.f32.mrb[0].mxu0
    %v2315 = vpop.f32.mrb[0].mxu0
    %v2316 = vadd.f32 %v2219, %v2315
    %v2317 = vpop.f32.mrb[0].mxu0
    %2318 = vmatprep.mubr.bf16.mxu0 %v1569
    %2319 = vmatmul.mubr.bf16.gmra.mrb[0].mxu0 %v1561
    %v2320 = vpop.f32.mrb[0].mxu0
    %v2321 = vadd.f32 %v2224, %v2320
    %v2322 = vpop.f32.mrb[0].mxu0
    %v2323 = vpop.f32.mrb[0].mxu0
    %v2324 = vadd.f32 %v2227, %v2323
    %v2325 = vpop.f32.mrb[0].mxu0
    %2326 = vmatprep.mubr.bf16.mxu0 %v1570
    %2327 = vmatmul.mubr.bf16.gmra.mrb[0].mxu0 %v1562
    %v2328 = vpop.f32.mrb[0].mxu0
    %v2329 = vadd.f32 %v2232, %v2328
    %v2330 = vpop.f32.mrb[0].mxu0
    %v2331 = vpop.f32.mrb[0].mxu0
    %v2332 = vadd.f32 %v2235, %v2331
    %v2333 = vpop.f32.mrb[0].mxu0
    %2334 = vmatprep.mubr.bf16.mxu0 %v1571
    %2335 = vmatmul.mubr.bf16.gmra.mrb[0].mxu0 %v1563
    %v2336 = vpop.f32.mrb[0].mxu0
    %v2337 = vadd.f32 %v2240, %v2336
    %v2338 = vpop.f32.mrb[0].mxu0
    %v2339 = vpop.f32.mrb[0].mxu0
    %v2340 = vadd.f32 %v2243, %v2339
    %v2341 = vpop.f32.mrb[0].mxu0
    %2342 = vmatprep.mubr.bf16.mxu0 %v1572
    %2343 = vmatmul.mubr.bf16.gmra.mrb[0].mxu0 %v1564
    %v2344 = vpop.f32.mrb[0].mxu0
    %v2345 = vadd.f32 %v2248, %v2344
    %v2346 = vpop.f32.mrb[0].mxu0
    %v2347 = vpop.f32.mrb[0].mxu0
    %v2348 = vadd.f32 %v2251, %v2347
    %v2349 = vpop.f32.mrb[0].mxu0
    %2350 = vmatprep.mubr.bf16.mxu0 %v1573
    %2351 = vmatmul.mubr.bf16.gmra.mrb[0].mxu0 %v1565
    %v2352 = vpop.f32.mrb[0].mxu0
    %v2353 = vadd.f32 %v2256, %v2352
    %v2354 = vpop.f32.mrb[0].mxu0
    %v2355 = vpop.f32.mrb[0].mxu0
    %v2356 = vadd.f32 %v2259, %v2355
    %v2357 = vpop.f32.mrb[0].mxu0
    %2358 = vmatprep.mubr.bf16.mxu0 %v1574
    %2359 = vmatmul.mubr.bf16.gmra.mrb[0].mxu0 %v1566
    %v2360 = vpop.f32.mrb[0].mxu0
    %v2361 = vadd.f32 %v2264, %v2360
    %v2362 = vpop.f32.mrb[0].mxu0
    %v2363 = vpop.f32.mrb[0].mxu0
    %v2364 = vadd.f32 %v2267, %v2363
    %v2365 = vpop.f32.mrb[0].mxu0
    %2366 = vdwg.mxu0
    %2367 = vmatprep.subr.bf16.mxu0 0
    %2368 = vmatpush1.bf16.msra.mxu0 %v2061
    %2369 = vmatprep.subr.bf16.mxu0 0
    %2370 = vmatpush1.bf16.msra.mxu0 %v2062
    %2371 = vmatprep.subr.bf16.mxu0 0
    %2372 = vmatpush1.bf16.msra.mxu0 %v2063
    %2373 = vmatprep.subr.bf16.mxu0 0
    %2374 = vmatpush1.bf16.msra.mxu0 %v2064
    %2375 = vmatprep.subr.bf16.mxu0 0
    %2376 = vmatpush1.bf16.msra.mxu0 %v2065
    %2377 = vmatprep.subr.bf16.mxu0 0
    %2378 = vmatpush1.bf16.msra.mxu0 %v2066
    %2379 = vmatprep.subr.bf16.mxu0 0
    %2380 = vmatpush1.bf16.msra.mxu0 %v2067
    %2381 = vmatprep.subr.bf16.mxu0 0
    %2382 = vmatpush1.bf16.msra.mxu0 %v2068
    %2383 = vmatprep.subr.bf16.mxu0 0
    %2384 = vmatpush1.bf16.msra.mxu0 %v2069
    %2385 = vmatprep.subr.bf16.mxu0 0
    %2386 = vmatpush1.bf16.msra.mxu0 %v2070
    %2387 = vmatprep.subr.bf16.mxu0 0
    %2388 = vmatpush1.bf16.msra.mxu0 %v2071
    %2389 = vmatprep.subr.bf16.mxu0 0
    %2390 = vmatpush1.bf16.msra.mxu0 %v2072
    %2391 = vmatprep.subr.bf16.mxu0 0
    %2392 = vmatpush1.bf16.msra.mxu0 %v2073
    %2393 = vmatprep.subr.bf16.mxu0 0
    %2394 = vmatpush1.bf16.msra.mxu0 %v2074
    %2395 = vmatprep.subr.bf16.mxu0 0
    %2396 = vmatpush1.bf16.msra.mxu0 %v2075
    %2397 = vmatprep.subr.bf16.mxu0 0
    %2398 = vmatpush1.bf16.msra.mxu0 %v2076
    %2399 = vmatprep.mubr.bf16.mxu0 %v1583
    %2400 = vmatmul.mubr.bf16.gmra.mrb[0].mxu0 %v1575
    %v2401 = vpop.f32.mrb[0].mxu0
    %v2402 = vadd.f32 %v2305, %v2401
    %v2403 = vpop.f32.mrb[0].mxu0
    %v2404 = vpop.f32.mrb[0].mxu0
    %v2405 = vadd.f32 %v2308, %v2404
    %v2406 = vpop.f32.mrb[0].mxu0
    %2407 = vmatprep.mubr.bf16.mxu0 %v1584
    %2408 = vmatmul.mubr.bf16.gmra.mrb[0].mxu0 %v1576
    %v2409 = vpop.f32.mrb[0].mxu0
    %v2410 = vadd.f32 %v2313, %v2409
    %v2411 = vpop.f32.mrb[0].mxu0
    %v2412 = vpop.f32.mrb[0].mxu0
    %v2413 = vadd.f32 %v2316, %v2412
    %v2414 = vpop.f32.mrb[0].mxu0
    %2415 = vmatprep.mubr.bf16.mxu0 %v1585
    %2416 = vmatmul.mubr.bf16.gmra.mrb[0].mxu0 %v1577
    %v2417 = vpop.f32.mrb[0].mxu0
    %v2418 = vadd.f32 %v2321, %v2417
    %v2419 = vpop.f32.mrb[0].mxu0
    %v2420 = vpop.f32.mrb[0].mxu0
    %v2421 = vadd.f32 %v2324, %v2420
    %v2422 = vpop.f32.mrb[0].mxu0
    %2423 = vmatprep.mubr.bf16.mxu0 %v1586
    %2424 = vmatmul.mubr.bf16.gmra.mrb[0].mxu0 %v1578
    %v2425 = vpop.f32.mrb[0].mxu0
    %v2426 = vadd.f32 %v2329, %v2425
    %v2427 = vpop.f32.mrb[0].mxu0
    %v2428 = vpop.f32.mrb[0].mxu0
    %v2429 = vadd.f32 %v2332, %v2428
    %v2430 = vpop.f32.mrb[0].mxu0
    %2431 = vmatprep.mubr.bf16.mxu0 %v1587
    %2432 = vmatmul.mubr.bf16.gmra.mrb[0].mxu0 %v1579
    %v2433 = vpop.f32.mrb[0].mxu0
    %v2434 = vadd.f32 %v2337, %v2433
    %v2435 = vpop.f32.mrb[0].mxu0
    %v2436 = vpop.f32.mrb[0].mxu0
    %v2437 = vadd.f32 %v2340, %v2436
    %v2438 = vpop.f32.mrb[0].mxu0
    %2439 = vmatprep.mubr.bf16.mxu0 %v1588
    %2440 = vmatmul.mubr.bf16.gmra.mrb[0].mxu0 %v1580
    %v2441 = vpop.f32.mrb[0].mxu0
    %v2442 = vadd.f32 %v2345, %v2441
    %v2443 = vpop.f32.mrb[0].mxu0
    %v2444 = vpop.f32.mrb[0].mxu0
    %v2445 = vadd.f32 %v2348, %v2444
    %v2446 = vpop.f32.mrb[0].mxu0
    %2447 = vmatprep.mubr.bf16.mxu0 %v1589
    %2448 = vmatmul.mubr.bf16.gmra.mrb[0].mxu0 %v1581
    %v2449 = vpop.f32.mrb[0].mxu0
    %v2450 = vadd.f32 %v2353, %v2449
    %v2451 = vpop.f32.mrb[0].mxu0
    %v2452 = vpop.f32.mrb[0].mxu0
    %v2453 = vadd.f32 %v2356, %v2452
    %v2454 = vpop.f32.mrb[0].mxu0
    %2455 = vmatprep.mubr.bf16.mxu0 %v1590
    %2456 = vmatmul.mubr.bf16.gmra.mrb[0].mxu0 %v1582
    %v2457 = vpop.f32.mrb[0].mxu0
    %v2458 = vadd.f32 %v2361, %v2457
    %v2459 = vpop.f32.mrb[0].mxu0
    %v2460 = vpop.f32.mrb[0].mxu0
    %v2461 = vadd.f32 %v2364, %v2460
    %v2462 = vpop.f32.mrb[0].mxu0
    %2463 = vdwg.mxu0
    %2464 = vmatprep.subr.bf16.mxu0 0
    %2465 = vmatpush1.bf16.msra.mxu0 %v2077
    %2466 = vmatprep.subr.bf16.mxu0 0
    %2467 = vmatpush1.bf16.msra.mxu0 %v2078
    %2468 = vmatprep.subr.bf16.mxu0 0
    %2469 = vmatpush1.bf16.msra.mxu0 %v2079
    %2470 = vmatprep.subr.bf16.mxu0 0
    %2471 = vmatpush1.bf16.msra.mxu0 %v2080
    %2472 = vmatprep.subr.bf16.mxu0 0
    %2473 = vmatpush1.bf16.msra.mxu0 %v2081
    %2474 = vmatprep.subr.bf16.mxu0 0
    %2475 = vmatpush1.bf16.msra.mxu0 %v2082
    %2476 = vmatprep.subr.bf16.mxu0 0
    %2477 = vmatpush1.bf16.msra.mxu0 %v2083
    %2478 = vmatprep.subr.bf16.mxu0 0
    %2479 = vmatpush1.bf16.msra.mxu0 %v2084
    %2480 = vmatprep.subr.bf16.mxu0 0
    %2481 = vmatpush1.bf16.msra.mxu0 %v2085
    %2482 = vmatprep.subr.bf16.mxu0 0
    %2483 = vmatpush1.bf16.msra.mxu0 %v2086
    %2484 = vmatprep.subr.bf16.mxu0 0
    %2485 = vmatpush1.bf16.msra.mxu0 %v2087
    %2486 = vmatprep.subr.bf16.mxu0 0
    %2487 = vmatpush1.bf16.msra.mxu0 %v2088
    %2488 = vmatprep.subr.bf16.mxu0 0
    %2489 = vmatpush1.bf16.msra.mxu0 %v2089
    %2490 = vmatprep.subr.bf16.mxu0 0
    %2491 = vmatpush1.bf16.msra.mxu0 %v2090
    %2492 = vmatprep.subr.bf16.mxu0 0
    %2493 = vmatpush1.bf16.msra.mxu0 %v2091
    %2494 = vmatprep.subr.bf16.mxu0 0
    %2495 = vmatpush1.bf16.msra.mxu0 %v2092
    %2496 = vmatprep.mubr.bf16.mxu0 %v1552
    %2497 = vmatmul.mubr.bf16.gmra.mrb[0].mxu0 %v1544
    %v2498 = vpop.f32.mrb[0].mxu0
    %v2499 = vadd.f32 %v2402, %v2498
    %v2500 = vpop.f32.mrb[0].mxu0
    %v2501 = vpop.f32.mrb[0].mxu0
    %v2502 = vadd.f32 %v2405, %v2501
    %v2503 = vpop.f32.mrb[0].mxu0
    %2504 = vmatprep.mubr.bf16.mxu0 %v1553
    %2505 = vmatmul.mubr.bf16.gmra.mrb[0].mxu0 %v1545
    %v2506 = vpop.f32.mrb[0].mxu0
    %v2507 = vadd.f32 %v2410, %v2506
    %v2508 = vpop.f32.mrb[0].mxu0
    %v2509 = vpop.f32.mrb[0].mxu0
    %v2510 = vadd.f32 %v2413, %v2509
    %v2511 = vpop.f32.mrb[0].mxu0
    %2512 = vmatprep.mubr.bf16.mxu0 %v1554
    %2513 = vmatmul.mubr.bf16.gmra.mrb[0].mxu0 %v1546
    %v2514 = vpop.f32.mrb[0].mxu0
    %v2515 = vadd.f32 %v2418, %v2514
    %v2516 = vpop.f32.mrb[0].mxu0
    %v2517 = vpop.f32.mrb[0].mxu0
    %v2518 = vadd.f32 %v2421, %v2517
    %v2519 = vpop.f32.mrb[0].mxu0
    %2520 = vmatprep.mubr.bf16.mxu0 %v1593
    %2521 = vmatmul.mubr.bf16.gmra.mrb[0].mxu0 %v1591
    %v2522 = vpop.f32.mrb[0].mxu0
    %v2523 = vadd.f32 %v2426, %v2522
    %v2524 = vpop.f32.mrb[0].mxu0
    %v2525 = vpop.f32.mrb[0].mxu0
    %v2526 = vadd.f32 %v2429, %v2525
    %v2527 = vpop.f32.mrb[0].mxu0
    %2528 = vmatprep.mubr.bf16.mxu0 %v1556
    %2529 = vmatmul.mubr.bf16.gmra.mrb[0].mxu0 %v1548
    %v2530 = vpop.f32.mrb[0].mxu0
    %v2531 = vadd.f32 %v2434, %v2530
    %v2532 = vpop.f32.mrb[0].mxu0
    %v2533 = vpop.f32.mrb[0].mxu0
    %v2534 = vadd.f32 %v2437, %v2533
    %v2535 = vpop.f32.mrb[0].mxu0
    %2536 = vmatprep.mubr.bf16.mxu0 %v1557
    %2537 = vmatmul.mubr.bf16.gmra.mrb[0].mxu0 %v1549
    %v2538 = vpop.f32.mrb[0].mxu0
    %v2539 = vadd.f32 %v2442, %v2538
    %v2540 = vpop.f32.mrb[0].mxu0
    %v2541 = vpop.f32.mrb[0].mxu0
    %v2542 = vadd.f32 %v2445, %v2541
    %v2543 = vpop.f32.mrb[0].mxu0
    %2544 = vmatprep.mubr.bf16.mxu0 %v1558
    %2545 = vmatmul.mubr.bf16.gmra.mrb[0].mxu0 %v1550
    %v2546 = vpop.f32.mrb[0].mxu0
    %v2547 = vadd.f32 %v2450, %v2546
    %v2548 = vpop.f32.mrb[0].mxu0
    %v2549 = vpop.f32.mrb[0].mxu0
    %v2550 = vadd.f32 %v2453, %v2549
    %v2551 = vpop.f32.mrb[0].mxu0
    %2552 = vmatprep.mubr.bf16.mxu0 %v1594
    %2553 = vmatmul.mubr.bf16.gmra.mrb[0].mxu0 %v1592
    %v2554 = vpop.f32.mrb[0].mxu0
    %v2555 = vadd.f32 %v2458, %v2554
    %v2556 = vpop.f32.mrb[0].mxu0
    %v2557 = vpop.f32.mrb[0].mxu0
    %v2558 = vadd.f32 %v2461, %v2557
    %v2559 = vpop.f32.mrb[0].mxu0
    %2560 = vdwg.mxu0
    %2561 = vmatprep.subr.bf16.mxu0 0
    %2562 = vmatpush1.bf16.msra.mxu0 %v2093
    %2563 = vmatprep.subr.bf16.mxu0 0
    %2564 = vmatpush1.bf16.msra.mxu0 %v2094
    %2565 = vmatprep.subr.bf16.mxu0 0
    %2566 = vmatpush1.bf16.msra.mxu0 %v2095
    %2567 = vmatprep.subr.bf16.mxu0 0
    %2568 = vmatpush1.bf16.msra.mxu0 %v2096
    %2569 = vmatprep.subr.bf16.mxu0 0
    %2570 = vmatpush1.bf16.msra.mxu0 %v2097
    %2571 = vmatprep.subr.bf16.mxu0 0
    %2572 = vmatpush1.bf16.msra.mxu0 %v2098
    %2573 = vmatprep.subr.bf16.mxu0 0
    %2574 = vmatpush1.bf16.msra.mxu0 %v2099
    %2575 = vmatprep.subr.bf16.mxu0 0
    %2576 = vmatpush1.bf16.msra.mxu0 %v2100
    %2577 = vmatprep.subr.bf16.mxu0 0
    %2578 = vmatpush1.bf16.msra.mxu0 0
    %2579 = vmatprep.subr.bf16.mxu0 0
    %2580 = vmatpush1.bf16.msra.mxu0 0
    %2581 = vmatprep.subr.bf16.mxu0 0
    %2582 = vmatpush1.bf16.msra.mxu0 0
    %2583 = vmatprep.subr.bf16.mxu0 0
    %2584 = vmatpush1.bf16.msra.mxu0 0
    %2585 = vmatprep.subr.bf16.mxu0 0
    %2586 = vmatpush1.bf16.msra.mxu0 0
    %2587 = vmatprep.subr.bf16.mxu0 0
    %2588 = vmatpush1.bf16.msra.mxu0 0
    %2589 = vmatprep.subr.bf16.mxu0 0
    %2590 = vmatpush1.bf16.msra.mxu0 0
    %2591 = vmatprep.subr.bf16.mxu0 0
    %2592 = vmatpush1.bf16.msra.mxu0 0
    %2593 = vmatprep.mubr.bf16.mxu0 0
    %2594 = vmatmul.mubr.bf16.gmra.mrb[0].mxu0 %v1560
    %v2595 = vpop.f32.mrb[0].mxu0
    %v2596 = vadd.f32 %v2499, %v2595
    %v2597 = vpop.f32.mrb[0].mxu0
    %v2598 = vpop.f32.mrb[0].mxu0
    %v2599 = vadd.f32 %v2502, %v2598
    %v2600 = vpop.f32.mrb[0].mxu0
    %2601 = vmatprep.mubr.bf16.mxu0 0
    %2602 = vmatmul.mubr.bf16.gmra.mrb[0].mxu0 %v1561
    %v2603 = vpop.f32.mrb[0].mxu0
    %v2604 = vadd.f32 %v2507, %v2603
    %v2605 = vpop.f32.mrb[0].mxu0
    %v2606 = vpop.f32.mrb[0].mxu0
    %v2607 = vadd.f32 %v2510, %v2606
    %v2608 = vpop.f32.mrb[0].mxu0
    %2609 = vmatprep.mubr.bf16.mxu0 0
    %2610 = vmatmul.mubr.bf16.gmra.mrb[0].mxu0 %v1562
    %v2611 = vpop.f32.mrb[0].mxu0
    %v2612 = vadd.f32 %v2515, %v2611
    %v2613 = vpop.f32.mrb[0].mxu0
    %v2614 = vpop.f32.mrb[0].mxu0
    %v2615 = vadd.f32 %v2518, %v2614
    %v2616 = vpop.f32.mrb[0].mxu0
    %2617 = vmatprep.mubr.bf16.mxu0 0
    %2618 = vmatmul.mubr.bf16.gmra.mrb[0].mxu0 %v1595
    %v2619 = vpop.f32.mrb[0].mxu0
    %v2620 = vadd.f32 %v2523, %v2619
    %v2621 = vpop.f32.mrb[0].mxu0
    %v2622 = vpop.f32.mrb[0].mxu0
    %v2623 = vadd.f32 %v2526, %v2622
    %v2624 = vpop.f32.mrb[0].mxu0
    %2625 = vmatprep.mubr.bf16.mxu0 0
    %2626 = vmatmul.mubr.bf16.gmra.mrb[0].mxu0 %v1564
    %v2627 = vpop.f32.mrb[0].mxu0
    %v2628 = vadd.f32 %v2531, %v2627
    %v2629 = vpop.f32.mrb[0].mxu0
    %v2630 = vpop.f32.mrb[0].mxu0
    %v2631 = vadd.f32 %v2534, %v2630
    %v2632 = vpop.f32.mrb[0].mxu0
    %2633 = vmatprep.mubr.bf16.mxu0 0
    %2634 = vmatmul.mubr.bf16.gmra.mrb[0].mxu0 %v1565
    %v2635 = vpop.f32.mrb[0].mxu0
    %v2636 = vadd.f32 %v2539, %v2635
    %v2637 = vpop.f32.mrb[0].mxu0
    %v2638 = vpop.f32.mrb[0].mxu0
    %v2639 = vadd.f32 %v2542, %v2638
    %v2640 = vpop.f32.mrb[0].mxu0
    %2641 = vmatprep.mubr.bf16.mxu0 0
    %2642 = vmatmul.mubr.bf16.gmra.mrb[0].mxu0 %v1566
    %v2643 = vpop.f32.mrb[0].mxu0
    %v2644 = vadd.f32 %v2547, %v2643
    %v2645 = vpop.f32.mrb[0].mxu0
    %v2646 = vpop.f32.mrb[0].mxu0
    %v2647 = vadd.f32 %v2550, %v2646
    %v2648 = vpop.f32.mrb[0].mxu0
    %2649 = vmatprep.mubr.bf16.mxu0 0
    %2650 = vmatmul.mubr.bf16.gmra.mrb[0].mxu0 %v1596
    %v2651 = vpop.f32.mrb[0].mxu0
    %v2652 = vadd.f32 %v2555, %v2651
    %v2653 = vpop.f32.mrb[0].mxu0
    %v2654 = vpop.f32.mrb[0].mxu0
    %v2655 = vadd.f32 %v2558, %v2654
    %v2656 = vpop.f32.mrb[0].mxu0
    %2657 = vdwg.mxu0
    %v2658 = vld [vmem:[%s5] sm:$0x1]
    %v2659 = vld [vmem:[%s6] sm:$0x1]
    %v2660 = vadd.f32 %v2596, %v2599
    %v2661 = vadd.f32 %v2660, %v2604
    %v2662 = vadd.f32 %v2661, %v2607
    %v2663 = vadd.f32 %v2662, %v2612
    %v2664 = vadd.f32 %v2663, %v2615
    %v2665 = vadd.f32 %v2664, %v2620
    %v2666 = vadd.f32 %v2665, %v2623
    %v2667 = vadd.f32 %v2666, %v2628
    %v2668 = vadd.f32 %v2667, %v2631
    %v2669 = vadd.f32 %v2668, %v2636
    %v2670 = vadd.f32 %v2669, %v2639
    %v2671 = vadd.f32 %v2670, %v2644
    %v2672 = vadd.f32 %v2671, %v2647
    %v2673 = vadd.f32 %v2672, %v2652
    %v2674 = vadd.f32 %v2673, %v2655
    %v2675 = vrot.slane %v2674, 4
    %v2676 = vadd.f32 %v2674, %v2675
    %v2677 = vrot.slane %v2676, 2
    %v2678 = vadd.f32 %v2676, %v2677
    %v2679 = vrot.slane %v2678, 1
    %v2680 = vadd.f32 %v2678, %v2679
    %v2681 = vmul.f32 %v2680, 0.0078125
    %v2682 = vsub.f32 %v2596, %v2681
    %v2683 = vsub.f32 %v2599, %v2681
    %v2684 = vsub.f32 %v2604, %v2681
    %v2685 = vsub.f32 %v2607, %v2681
    %v2686 = vsub.f32 %v2612, %v2681
    %v2687 = vsub.f32 %v2615, %v2681
    %v2688 = vsub.f32 %v2620, %v2681
    %v2689 = vsub.f32 %v2623, %v2681
    %v2690 = vsub.f32 %v2628, %v2681
    %v2691 = vsub.f32 %v2631, %v2681
    %v2692 = vsub.f32 %v2636, %v2681
    %v2693 = vsub.f32 %v2639, %v2681
    %v2694 = vsub.f32 %v2644, %v2681
    %v2695 = vsub.f32 %v2647, %v2681
    %v2696 = vsub.f32 %v2652, %v2681
    %v2697 = vsub.f32 %v2655, %v2681
    %v2698 = vmul.f32 %v2682, %v2682
    %v2699 = vmul.f32 %v2683, %v2683
    %v2700 = vmul.f32 %v2684, %v2684
    %v2701 = vmul.f32 %v2685, %v2685
    %v2702 = vmul.f32 %v2686, %v2686
    %v2703 = vmul.f32 %v2687, %v2687
    %v2704 = vmul.f32 %v2688, %v2688
    %v2705 = vmul.f32 %v2689, %v2689
    %v2706 = vmul.f32 %v2690, %v2690
    %v2707 = vmul.f32 %v2691, %v2691
    %v2708 = vmul.f32 %v2692, %v2692
    %v2709 = vmul.f32 %v2693, %v2693
    %v2710 = vmul.f32 %v2694, %v2694
    %v2711 = vmul.f32 %v2695, %v2695
    %v2712 = vmul.f32 %v2696, %v2696
    %v2713 = vmul.f32 %v2697, %v2697
    %v2714 = vadd.f32 %v2698, %v2699
    %v2715 = vadd.f32 %v2714, %v2700
    %v2716 = vadd.f32 %v2715, %v2701
    %v2717 = vadd.f32 %v2716, %v2702
    %v2718 = vadd.f32 %v2717, %v2703
    %v2719 = vadd.f32 %v2718, %v2704
    %v2720 = vadd.f32 %v2719, %v2705
    %v2721 = vadd.f32 %v2720, %v2706
    %v2722 = vadd.f32 %v2721, %v2707
    %v2723 = vadd.f32 %v2722, %v2708
    %v2724 = vadd.f32 %v2723, %v2709
    %v2725 = vadd.f32 %v2724, %v2710
    %v2726 = vadd.f32 %v2725, %v2711
    %v2727 = vadd.f32 %v2726, %v2712
    %v2728 = vadd.f32 %v2727, %v2713
    %v2729 = vrot.slane %v2728, 4
    %v2730 = vadd.f32 %v2728, %v2729
    %v2731 = vrot.slane %v2730, 2
    %v2732 = vadd.f32 %v2730, %v2731
    %v2733 = vrot.slane %v2732, 1
    %v2734 = vadd.f32 %v2732, %v2733
    %v2735 = vmul.f32 %v2734, 0.0078125
    %v2736 = vadd.f32 %v2735, 1e-05
    %v2737 = vrsqrt.pop %v2736
    %v2738 = vmul.f32 %v2658, %v2737
    %v2740 = vlaneseq
    %v2741 = vshrl.u32 %v2740, 7
    %v2742 = vsub.s32 0, %v2741
    %v2743 = vrot.slane %v2738, %v2742
    %v2745 = vmul.f32 %v2682, %v2743
    %v2746 = vmul.f32 %v2683, %v2743
    %v2747 = vmul.f32 %v2684, %v2743
    %v2748 = vmul.f32 %v2685, %v2743
    %v2749 = vmul.f32 %v2686, %v2743
    %v2750 = vmul.f32 %v2687, %v2743
    %v2751 = vmul.f32 %v2688, %v2743
    %v2752 = vmul.f32 %v2689, %v2743
    %v2753 = vmul.f32 %v2690, %v2743
    %v2754 = vmul.f32 %v2691, %v2743
    %v2755 = vmul.f32 %v2692, %v2743
    %v2756 = vmul.f32 %v2693, %v2743
    %v2757 = vmul.f32 %v2694, %v2743
    %v2758 = vmul.f32 %v2695, %v2743
    %v2759 = vmul.f32 %v2696, %v2743
    %v2760 = vmul.f32 %v2697, %v2743
    %v2762 = vlaneseq
    %v2763 = vshrl.u32 %v2762, 7
    %v2764 = vsub.s32 0, %v2763
    %v2765 = vrot.slane %v2659, %v2764
    %v2767 = vadd.f32 %v2745, %v2765
    %v2768 = vadd.f32 %v2746, %v2765
    %v2769 = vadd.f32 %v2747, %v2765
    %v2770 = vadd.f32 %v2748, %v2765
    %v2771 = vadd.f32 %v2749, %v2765
    %v2772 = vadd.f32 %v2750, %v2765
    %v2773 = vadd.f32 %v2751, %v2765
    %v2774 = vadd.f32 %v2752, %v2765
    %v2775 = vadd.f32 %v2753, %v2765
    %v2776 = vadd.f32 %v2754, %v2765
    %v2777 = vadd.f32 %v2755, %v2765
    %v2778 = vadd.f32 %v2756, %v2765
    %v2779 = vadd.f32 %v2757, %v2765
    %v2780 = vadd.f32 %v2758, %v2765
    %v2781 = vadd.f32 %v2759, %v2765
    %v2782 = vadd.f32 %v2760, %v2765
    %v2783 = vadd.f32 %v2767, %v69
    %v2784 = vadd.f32 %v2768, %v70
    %v2785 = vadd.f32 %v2769, %v71
    %v2786 = vadd.f32 %v2770, %v72
    %v2787 = vadd.f32 %v2771, %v73
    %v2788 = vadd.f32 %v2772, %v74
    %v2789 = vadd.f32 %v2773, %v75
    %v2790 = vadd.f32 %v2774, %v76
    %v2791 = vadd.f32 %v2775, %v77
    %v2792 = vadd.f32 %v2776, %v78
    %v2793 = vadd.f32 %v2777, %v79
    %v2794 = vadd.f32 %v2778, %v80
    %v2795 = vadd.f32 %v2779, %v81
    %v2796 = vadd.f32 %v2780, %v82
    %v2797 = vadd.f32 %v2781, %v83
    %v2798 = vadd.f32 %v2782, %v84
    %v2799 = vmax.f32 %v2783, 0.0
    %v2800 = vmax.f32 %v2784, 0.0
    %v2801 = vmax.f32 %v2785, 0.0
    %v2802 = vmax.f32 %v2786, 0.0
    %v2803 = vmax.f32 %v2787, 0.0
    %v2804 = vmax.f32 %v2788, 0.0
    %v2805 = vmax.f32 %v2789, 0.0
    %v2806 = vmax.f32 %v2790, 0.0
    %v2807 = vmax.f32 %v2791, 0.0
    %v2808 = vmax.f32 %v2792, 0.0
    %v2809 = vmax.f32 %v2793, 0.0
    %v2810 = vmax.f32 %v2794, 0.0
    %v2811 = vmax.f32 %v2795, 0.0
    %v2812 = vmax.f32 %v2796, 0.0
    %v2813 = vmax.f32 %v2797, 0.0
    %v2814 = vmax.f32 %v2798, 0.0
    %2815 = vst [vmem:[#allocation9] sm:$0xff] %v2799
    %2816 = vst [vmem:[#allocation9 + $0x8] sm:$0xff] %v2800
    %2817 = vst [vmem:[#allocation9 + $0x10] sm:$0xff] %v2801
    %2818 = vst [vmem:[#allocation9 + $0x18] sm:$0xff] %v2802
    %2819 = vst [vmem:[#allocation9 + $0x20] sm:$0xff] %v2803
    %2820 = vst [vmem:[#allocation9 + $0x28] sm:$0xff] %v2804
    %2821 = vst [vmem:[#allocation9 + $0x30] sm:$0xff] %v2805
    %2822 = vst [vmem:[#allocation9 + $0x38] sm:$0xff] %v2806
    %2823 = vst [vmem:[#allocation9 + $0x40] sm:$0xff] %v2807
    %2824 = vst [vmem:[#allocation9 + $0x48] sm:$0xff] %v2808
    %2825 = vst [vmem:[#allocation9 + $0x50] sm:$0xff] %v2809
    %2826 = vst [vmem:[#allocation9 + $0x58] sm:$0xff] %v2810
    %2827 = vst [vmem:[#allocation9 + $0x60] sm:$0xff] %v2811
    %2828 = vst [vmem:[#allocation9 + $0x68] sm:$0xff] %v2812
    %2829 = vst [vmem:[#allocation9 + $0x70] sm:$0xff] %v2813
    %2830 = vst [vmem:[#allocation9 + $0x78] sm:$0xff] %v2814
    // Predicated region
    $region42: #{residual_forward_nhwc.1} parent=1 // pred_check
      _
    $region43: #{residual_forward_nhwc.1} parent=1 // pred_check_branch
      %2832 = sbr.rel (0) target = $region45
    $region44: #{residual_forward_nhwc.1} parent=1 // pred_region
      %s2834 = ssub.s32 2048, 2048
      %2835 = vsyncadd [#allocation5], %s2834
      %s2836 = sshll.u32 [#allocation9], 4
      %s2837 = int_to_ptr.vmem [resolvable:$true] %s2836
      %2842 = dma.vmem_to_hbm [thread:$0]  %s2837, 2048, %s7, [#allocation5], 128, 128, 8
    $region45: #{residual_forward_nhwc.1} parent=1 // pred_fallthru
      _
    // Predicated region
    $region46: #{residual_forward_nhwc.1} parent=1 // pred_check
      _
    $region47: #{residual_forward_nhwc.1} parent=1 // pred_check_branch
      %2844 = sbr.rel (0) target = $region49
    $region48: #{residual_forward_nhwc.1} parent=1 // pred_region
      %2845 = dma.done [#allocation5], 2048
    $region49: #{residual_forward_nhwc.1} parent=1 // pred_fallthru
      _
    %2846 = vsyncpa [#allocation4], 1
    %2847 = vsyncpa [#allocation7], 1
    %2848 = vsyncpa [#allocation5], 1

</llo_original>
